<compile_context>
chip_gen: v7x
topology: tpu7x:2x2x1
jax: 0.10.0
libtpu: 0.0.40
codegen_flags: <defaults>
</compile_context>

<pallas_src>
import math
import functools

import jax
import jax.numpy as jnp
from jax.experimental import pallas as pl
from jax.experimental.pallas import tpu as pltpu


# ----------------------------------------------------------------------------
# Fully fused LPA-GCN forward kernel (both layers + relu + log_softmax).
# Per layer (len_walk is a compile-time constant):
#   am   = A * A_mask                         (un-normalized, 0/1-ish)
#   inv  = 1 / rowsum(|am|)                   (L1 row-normalization as a scale)
#   Xout = inv * (am @ (X @ W)) + bias        (== normalize(am,p=1,dim=1) @ XW + b)
#   yout = (inv*am)^len_walk @ y              (right-associated propagation)
# ----------------------------------------------------------------------------
def _fused_lpa_gcn_kernel(x_ref, a_ref, y_ref,
                          w1_ref, b1_ref, m1_ref,
                          w2_ref, b2_ref, m2_ref,
                          out_ref, *, len_walk):
    f32 = jnp.float32
    bf16 = jnp.bfloat16

    a = a_ref[...]

    def prep(mask):
        # Keep the adjacency un-normalized; fold normalization into a
        # post-matmul scale.  am entries are products of 0/1 values, so the
        # bf16 cast for the MXU is exact.
        am = a * mask                                        # f32 on VPU
        row_l1 = jnp.maximum(jnp.sum(jnp.abs(am), axis=1, keepdims=True), 1e-12)
        # EUP approximate reciprocal (separate VLIW slot) + one Newton step
        # on the tiny [N,1] vector to recover ~f32 accuracy for free.
        inv = pl.reciprocal(row_l1, approx=True)
        inv = inv * (2.0 - row_l1 * inv)
        return am.astype(bf16), inv

    def layer(am_bf, inv, x, yv, w, b):
        o = w.shape[1]
        xw = jnp.dot(x.astype(bf16), w.astype(bf16),
                     preferred_element_type=f32)
        if len_walk == 0:                                    # An^0 = I => yout = y
            xo = inv * jnp.dot(am_bf, xw.astype(bf16),
                               preferred_element_type=f32) + b
            return xo, yv
        # Right-associated propagation: v = An^{len_walk-1} @ y (static unroll),
        # applying inv after every hop.  The narrow [N,C] hops waste MXU lanes
        # but each one is a single cheap pass.
        # TODO(synk): if len_walk grows large, square An (log2(len_walk) hops)
        # instead of chaining 8-lane-wide passes.
        v = yv
        for _ in range(len_walk - 1):
            v = inv * jnp.dot(am_bf, v.astype(bf16), preferred_element_type=f32)
        # Fuse the two final An multiplies into one MXU pass: An @ [Xw | v].
        rhs = jnp.concatenate([xw, v], axis=1).astype(bf16)
        res = inv * jnp.dot(am_bf, rhs, preferred_element_type=f32)
        return res[:, :o] + b, res[:, o:]

    # Layer 1 (build am1, use it, then build am2 -> fewer [N,N] buffers live).
    am1_bf, inv1 = prep(m1_ref[...])
    x1, yh1 = layer(am1_bf, inv1, x_ref[...], y_ref[...], w1_ref[...], b1_ref[...])
    x1 = jnp.maximum(x1, 0.0)                                # inter-layer relu, fused

    am2_bf, inv2 = prep(m2_ref[...])
    x2, yh2 = layer(am2_bf, inv2, x1, yh1, w2_ref[...], b2_ref[...])

    def log_softmax(v):
        z = v - jnp.max(v, axis=1, keepdims=True)
        return z - jnp.log(jnp.sum(jnp.exp(z), axis=1, keepdims=True))

    # Single dense store of the packed [N, 2C] result (no zero-pad lanes).
    out_ref[...] = jnp.concatenate([log_softmax(x2), log_softmax(yh2)],
                                   axis=1).astype(out_ref.dtype)


def lpa_gcn_model(X, A, y, params, *, len_walk):
    """Fused forward of LPA_GCN_model in a single pallas_call.

    At the toy N=128 the whole working set (~250 KiB) is VMEM-resident, so a
    single launch removes the launch/DMA overhead that dominated a 4-call
    version.  Returns (log_softmax(X2), log_softmax(yhat2)), each [N, C].
    """
    W1, b1, mask1, W2, b2, mask2 = params
    N, Fdim = X.shape
    H = W1.shape[1]
    C = W2.shape[1]
    assert y.shape == (N, C)

    kernel = functools.partial(_fused_lpa_gcn_kernel, len_walk=len_walk)

    def full(shape):
        nd = len(shape)
        return pl.BlockSpec(shape, lambda i, nd=nd: (0,) * nd)

    # Advisory cost estimate so XLA can schedule surrounding work sensibly.
    hops = max(len_walk - 1, 0)
    flops = (2 * N * Fdim * H + 2 * N * H * C                 # X @ W (both layers)
             + 2 * 2 * N * N * hops * C                        # propagation hops
             + 2 * N * N * (H + C) + 2 * N * N * (2 * C)       # fused An @ [Xw|v]
             + 6 * N * N)                                      # mask-mul + row L1 sums
    transcendentals = 2 * N * (C + 1) + 2 * N                  # exp/log + reciprocals
    bytes_accessed = 4 * (3 * N * N + N * Fdim + N * C
                          + Fdim * H + H + H * C + C + N * 2 * C)
    cost = pl.CostEstimate(flops=int(flops),
                           transcendentals=int(transcendentals),
                           bytes_accessed=int(bytes_accessed))

    # TODO(synk): when N scales beyond a few thousand, switch to a row-tiled
    # grid over A / masks: mark the row axis dimension_semantics=("parallel",)
    # (uses both TCs on v7x), size the row tile for v7x's 64 MiB VMEM (vs
    # 128 MiB on v5e/v6e), raise vmem_limit_bytes past the 16/32 MiB scoped
    # defaults, pass A / masks as bf16 from the wrapper (kernel is HBM-bound
    # at scale), and use pipeline_mode=pl.Buffered(1) on any non-pipelined
    # resident [N,N] inputs to avoid pointless double-buffering.
    out = pl.pallas_call(
        kernel,
        grid=(1,),
        in_specs=[full((N, Fdim)),   # X
                  full((N, N)),      # A
                  full((N, C)),      # y
                  full((Fdim, H)),   # W1
                  full((1, H)),      # b1
                  full((N, N)),      # A_mask1
                  full((H, C)),      # W2
                  full((1, C)),      # b2
                  full((N, N))],     # A_mask2
        out_specs=full((N, 2 * C)),
        out_shape=jax.ShapeDtypeStruct((N, 2 * C), jnp.float32),
        cost_estimate=cost,
        compiler_params=pltpu.CompilerParams(
            dimension_semantics=("arbitrary",)),
    )(X, A, y, W1, b1, mask1, W2, b2, mask2)

    return out[:, :C], out[:, C:]


# ----------------------------------------------------------------------------
# Pure-JAX reference (for validation only)
# ----------------------------------------------------------------------------
def _layer_ref(X, A, y, W, mask, bias, len_walk):
    Xw = X @ W
    Am = A * mask
    An = Am / jnp.maximum(jnp.sum(jnp.abs(Am), axis=1, keepdims=True), 1e-12)
    Xo = An @ Xw + bias
    Ap = jnp.linalg.matrix_power(An, len_walk)
    return Xo, Ap @ y


def _model_ref(X, A, y, params, len_walk):
    W1, b1, mask1, W2, b2, mask2 = params
    X1, yh1 = _layer_ref(X, A, y, W1, mask1, b1, len_walk)
    X2, yh2 = _layer_ref(jnp.maximum(X1, 0.0), A, yh1, W2, mask2, b2, len_walk)
    return jax.nn.log_softmax(X2, axis=1), jax.nn.log_softmax(yh2, axis=1)


if __name__ == "__main__":
    N, Fdim, hid, C, len_walk = 128, 32, 32, 8, 2

    key = jax.random.PRNGKey(0)
    ka, kx, kl, kw1, kb1, kw2, kb2 = jax.random.split(key, 7)

    # Adjacency: sparse-ish 0/1 matrix with self loops (so rows are non-zero).
    A = (jax.random.uniform(ka, (N, N), jnp.float32) > 0.85).astype(jnp.float32)
    A = A + jnp.eye(N, dtype=jnp.float32)

    X = jax.random.normal(kx, (N, Fdim), dtype=jnp.float32)
    labels = jax.random.randint(kl, (N,), 0, C)
    y = jax.nn.one_hot(labels, C, dtype=jnp.float32)

    # Parameters, initialized like reset_parameters(): U(-stdv, stdv), stdv=1/sqrt(O)
    stdv1 = 1.0 / math.sqrt(hid)
    W1 = jax.random.uniform(kw1, (Fdim, hid), jnp.float32, -stdv1, stdv1)
    b1 = jax.random.uniform(kb1, (1, hid), jnp.float32, -stdv1, stdv1)
    stdv2 = 1.0 / math.sqrt(C)
    W2 = jax.random.uniform(kw2, (hid, C), jnp.float32, -stdv2, stdv2)
    b2 = jax.random.uniform(kb2, (1, C), jnp.float32, -stdv2, stdv2)
    # A_mask is Parameter(A.clone()) for each layer
    mask1 = A
    mask2 = A
    params = (W1, b1, mask1, W2, b2, mask2)

    fwd = jax.jit(functools.partial(lpa_gcn_model, len_walk=len_walk))
    out_X, out_y = fwd(X, A, y, params)
    jax.block_until_ready((out_X, out_y))

    # Validate against pure-JAX reference (loose tol: bf16 MXU operands).
    ref_X, ref_y = _model_ref(X, A, y, params, len_walk)
    assert out_X.shape == (N, C) and out_y.shape == (N, C)
    assert bool(jnp.all(jnp.isfinite(out_X))) and bool(jnp.all(jnp.isfinite(out_y)))
    assert jnp.allclose(out_X, ref_X, atol=2e-2, rtol=2e-2)
    assert jnp.allclose(out_y, ref_y, atol=2e-2, rtol=2e-2)

    print("KERNEL_OK")
</pallas_src>

<mosaic_0001>
module attributes {stable_mosaic.version = 11 : i64} {
  func.func @_fused_lpa_gcn_kernel(%arg0: i32, %arg1: memref<128x32xf32, #tpu.memory_space<vmem>>, %arg2: memref<128x128xf32, #tpu.memory_space<vmem>>, %arg3: memref<128x8xf32, #tpu.memory_space<vmem>>, %arg4: memref<32x32xf32, #tpu.memory_space<vmem>>, %arg5: memref<1x32xf32, #tpu.memory_space<vmem>>, %arg6: memref<128x128xf32, #tpu.memory_space<vmem>>, %arg7: memref<32x8xf32, #tpu.memory_space<vmem>>, %arg8: memref<1x8xf32, #tpu.memory_space<vmem>>, %arg9: memref<128x128xf32, #tpu.memory_space<vmem>>, %arg10: memref<128x16xf32, #tpu.memory_space<vmem>>) attributes {dimension_semantics = [#tpu.dimension_semantics<arbitrary>], iteration_bounds = array<i64: 1>, scalar_prefetch = 0 : i64, scratch_operands = 0 : i64, tpu.core_type = #tpu.core_type<tc>, window_params = [{pipeline_mode = #tpu.pipeline_mode<synchronous>, transform_indices = @transform_0, window_bounds = array<i64: 128, 32>}, {pipeline_mode = #tpu.pipeline_mode<synchronous>, transform_indices = @transform_1, window_bounds = array<i64: 128, 128>}, {pipeline_mode = #tpu.pipeline_mode<synchronous>, transform_indices = @transform_2, window_bounds = array<i64: 128, 8>}, {pipeline_mode = #tpu.pipeline_mode<synchronous>, transform_indices = @transform_3, window_bounds = array<i64: 32, 32>}, {pipeline_mode = #tpu.pipeline_mode<synchronous>, transform_indices = @transform_4, window_bounds = array<i64: 1, 32>}, {pipeline_mode = #tpu.pipeline_mode<synchronous>, transform_indices = @transform_5, window_bounds = array<i64: 128, 128>}, {pipeline_mode = #tpu.pipeline_mode<synchronous>, transform_indices = @transform_6, window_bounds = array<i64: 32, 8>}, {pipeline_mode = #tpu.pipeline_mode<synchronous>, transform_indices = @transform_7, window_bounds = array<i64: 1, 8>}, {pipeline_mode = #tpu.pipeline_mode<synchronous>, transform_indices = @transform_8, window_bounds = array<i64: 128, 128>}, {pipeline_mode = #tpu.pipeline_mode<synchronous>, transform_indices = @transform_9, window_bounds = array<i64: 128, 16>}]} {
    %c0 = arith.constant 0 : index
    %c0_0 = arith.constant 0 : index
    %0 = vector.load %arg2[%c0, %c0_0] : memref<128x128xf32, #tpu.memory_space<vmem>>, vector<128x128xf32>
    %c0_1 = arith.constant 0 : index
    %c0_2 = arith.constant 0 : index
    %1 = vector.load %arg6[%c0_1, %c0_2] : memref<128x128xf32, #tpu.memory_space<vmem>>, vector<128x128xf32>
    %2 = arith.mulf %0, %1 : vector<128x128xf32>
    %3 = math.absf %2 : vector<128x128xf32>
    %cst = arith.constant dense<0.000000e+00> : vector<128xf32>
    %4 = vector.multi_reduction <add>, %3, %cst [1] : vector<128x128xf32> to vector<128xf32>
    %5 = vector.shape_cast %4 : vector<128xf32> to vector<128x1xf32>
    %cst_3 = arith.constant 9.99999996E-13 : f32
    %6 = vector.broadcast %cst_3 : f32 to vector<128x1xf32>
    %7 = arith.maximumf %5, %6 : vector<128x1xf32>
    %8 = tpu.reciprocal %7 {approx = true} : vector<128x1xf32> -> vector<128x1xf32>
    %9 = arith.mulf %7, %8 : vector<128x1xf32>
    %cst_4 = arith.constant 2.000000e+00 : f32
    %10 = vector.broadcast %cst_4 : f32 to vector<128x1xf32>
    %11 = arith.subf %10, %9 : vector<128x1xf32>
    %12 = arith.mulf %8, %11 : vector<128x1xf32>
    %13 = arith.truncf %2 : vector<128x128xf32> to vector<128x128xbf16>
    %c0_5 = arith.constant 0 : index
    %c0_6 = arith.constant 0 : index
    %14 = vector.load %arg1[%c0_5, %c0_6] : memref<128x32xf32, #tpu.memory_space<vmem>>, vector<128x32xf32>
    %c0_7 = arith.constant 0 : index
    %c0_8 = arith.constant 0 : index
    %15 = vector.load %arg3[%c0_7, %c0_8] : memref<128x8xf32, #tpu.memory_space<vmem>>, vector<128x8xf32>
    %c0_9 = arith.constant 0 : index
    %c0_10 = arith.constant 0 : index
    %16 = vector.load %arg4[%c0_9, %c0_10] : memref<32x32xf32, #tpu.memory_space<vmem>>, vector<32x32xf32>
    %c0_11 = arith.constant 0 : index
    %c0_12 = arith.constant 0 : index
    %17 = vector.load %arg5[%c0_11, %c0_12] : memref<1x32xf32, #tpu.memory_space<vmem>>, vector<1x32xf32>
    %18 = arith.truncf %14 : vector<128x32xf32> to vector<128x32xbf16>
    %19 = arith.truncf %16 : vector<32x32xf32> to vector<32x32xbf16>
    %cst_13 = arith.constant dense<0.000000e+00> : vector<128x32xf32>
    %20 = tpu.matmul %18, %19, %cst_13 {dimension_numbers = #tpu.dot_dimension_numbers<[1], [0], [0], [1], [0, 0, 1, 1], [], []>} : vector<128x32xbf16>, vector<32x32xbf16>, vector<128x32xf32> -> vector<128x32xf32>
    %21 = arith.truncf %15 : vector<128x8xf32> to vector<128x8xbf16>
    %cst_14 = arith.constant dense<0.000000e+00> : vector<128x8xf32>
    %22 = tpu.matmul %13, %21, %cst_14 {dimension_numbers = #tpu.dot_dimension_numbers<[1], [0], [0], [1], [0, 0, 1, 1], [], []>} : vector<128x128xbf16>, vector<128x8xbf16>, vector<128x8xf32> -> vector<128x8xf32>
    %23 = vector.broadcast %12 : vector<128x1xf32> to vector<128x8xf32>
    %24 = arith.mulf %23, %22 : vector<128x8xf32>
    %25 = tpu.concatenate %20, %24 in 1 : vector<128x32xf32>, vector<128x8xf32> -> vector<128x40xf32>
    %26 = arith.truncf %25 : vector<128x40xf32> to vector<128x40xbf16>
    %cst_15 = arith.constant dense<0.000000e+00> : vector<128x40xf32>
    %27 = tpu.matmul %13, %26, %cst_15 {dimension_numbers = #tpu.dot_dimension_numbers<[1], [0], [0], [1], [0, 0, 1, 1], [], []>} : vector<128x128xbf16>, vector<128x40xbf16>, vector<128x40xf32> -> vector<128x40xf32>
    %28 = vector.broadcast %12 : vector<128x1xf32> to vector<128x40xf32>
    %29 = arith.mulf %28, %27 : vector<128x40xf32>
    %30 = vector.extract_strided_slice %29 {offsets = [0, 0], sizes = [128, 32], strides = [1, 1]} : vector<128x40xf32> to vector<128x32xf32>
    %31 = vector.broadcast %17 : vector<1x32xf32> to vector<128x32xf32>
    %32 = arith.addf %30, %31 : vector<128x32xf32>
    %33 = vector.extract_strided_slice %29 {offsets = [0, 32], sizes = [128, 8], strides = [1, 1]} : vector<128x40xf32> to vector<128x8xf32>
    %cst_16 = arith.constant 0.000000e+00 : f32
    %34 = vector.broadcast %cst_16 : f32 to vector<128x32xf32>
    %35 = arith.maximumf %32, %34 : vector<128x32xf32>
    %c0_17 = arith.constant 0 : index
    %c0_18 = arith.constant 0 : index
    %36 = vector.load %arg9[%c0_17, %c0_18] : memref<128x128xf32, #tpu.memory_space<vmem>>, vector<128x128xf32>
    %37 = arith.mulf %0, %36 : vector<128x128xf32>
    %38 = math.absf %37 : vector<128x128xf32>
    %cst_19 = arith.constant dense<0.000000e+00> : vector<128xf32>
    %39 = vector.multi_reduction <add>, %38, %cst_19 [1] : vector<128x128xf32> to vector<128xf32>
    %40 = vector.shape_cast %39 : vector<128xf32> to vector<128x1xf32>
    %cst_20 = arith.constant 9.99999996E-13 : f32
    %41 = vector.broadcast %cst_20 : f32 to vector<128x1xf32>
    %42 = arith.maximumf %40, %41 : vector<128x1xf32>
    %43 = tpu.reciprocal %42 {approx = true} : vector<128x1xf32> -> vector<128x1xf32>
    %44 = arith.mulf %42, %43 : vector<128x1xf32>
    %cst_21 = arith.constant 2.000000e+00 : f32
    %45 = vector.broadcast %cst_21 : f32 to vector<128x1xf32>
    %46 = arith.subf %45, %44 : vector<128x1xf32>
    %47 = arith.mulf %43, %46 : vector<128x1xf32>
    %48 = arith.truncf %37 : vector<128x128xf32> to vector<128x128xbf16>
    %c0_22 = arith.constant 0 : index
    %c0_23 = arith.constant 0 : index
    %49 = vector.load %arg7[%c0_22, %c0_23] : memref<32x8xf32, #tpu.memory_space<vmem>>, vector<32x8xf32>
    %c0_24 = arith.constant 0 : index
    %c0_25 = arith.constant 0 : index
    %50 = vector.load %arg8[%c0_24, %c0_25] : memref<1x8xf32, #tpu.memory_space<vmem>>, vector<1x8xf32>
    %51 = arith.truncf %35 : vector<128x32xf32> to vector<128x32xbf16>
    %52 = arith.truncf %49 : vector<32x8xf32> to vector<32x8xbf16>
    %cst_26 = arith.constant dense<0.000000e+00> : vector<128x8xf32>
    %53 = tpu.matmul %51, %52, %cst_26 {dimension_numbers = #tpu.dot_dimension_numbers<[1], [0], [0], [1], [0, 0, 1, 1], [], []>} : vector<128x32xbf16>, vector<32x8xbf16>, vector<128x8xf32> -> vector<128x8xf32>
    %54 = arith.truncf %33 : vector<128x8xf32> to vector<128x8xbf16>
    %cst_27 = arith.constant dense<0.000000e+00> : vector<128x8xf32>
    %55 = tpu.matmul %48, %54, %cst_27 {dimension_numbers = #tpu.dot_dimension_numbers<[1], [0], [0], [1], [0, 0, 1, 1], [], []>} : vector<128x128xbf16>, vector<128x8xbf16>, vector<128x8xf32> -> vector<128x8xf32>
    %56 = vector.broadcast %47 : vector<128x1xf32> to vector<128x8xf32>
    %57 = arith.mulf %56, %55 : vector<128x8xf32>
    %58 = tpu.concatenate %53, %57 in 1 : vector<128x8xf32>, vector<128x8xf32> -> vector<128x16xf32>
    %59 = arith.truncf %58 : vector<128x16xf32> to vector<128x16xbf16>
    %cst_28 = arith.constant dense<0.000000e+00> : vector<128x16xf32>
    %60 = tpu.matmul %48, %59, %cst_28 {dimension_numbers = #tpu.dot_dimension_numbers<[1], [0], [0], [1], [0, 0, 1, 1], [], []>} : vector<128x128xbf16>, vector<128x16xbf16>, vector<128x16xf32> -> vector<128x16xf32>
    %61 = vector.broadcast %47 : vector<128x1xf32> to vector<128x16xf32>
    %62 = arith.mulf %61, %60 : vector<128x16xf32>
    %63 = vector.extract_strided_slice %62 {offsets = [0, 0], sizes = [128, 8], strides = [1, 1]} : vector<128x16xf32> to vector<128x8xf32>
    %64 = vector.broadcast %50 : vector<1x8xf32> to vector<128x8xf32>
    %65 = arith.addf %63, %64 : vector<128x8xf32>
    %66 = vector.extract_strided_slice %62 {offsets = [0, 8], sizes = [128, 8], strides = [1, 1]} : vector<128x16xf32> to vector<128x8xf32>
    %cst_29 = arith.constant dense<0xFF800000> : vector<128xf32>
    %67 = vector.multi_reduction <maximumf>, %65, %cst_29 [1] : vector<128x8xf32> to vector<128xf32>
    %68 = vector.shape_cast %67 : vector<128xf32> to vector<128x1xf32>
    %69 = vector.broadcast %68 : vector<128x1xf32> to vector<128x8xf32>
    %70 = arith.subf %65, %69 : vector<128x8xf32>
    %71 = math.exp %70 : vector<128x8xf32>
    %cst_30 = arith.constant dense<0.000000e+00> : vector<128xf32>
    %72 = vector.multi_reduction <add>, %71, %cst_30 [1] : vector<128x8xf32> to vector<128xf32>
    %73 = vector.shape_cast %72 : vector<128xf32> to vector<128x1xf32>
    %74 = math.log %73 : vector<128x1xf32>
    %75 = vector.broadcast %74 : vector<128x1xf32> to vector<128x8xf32>
    %76 = arith.subf %70, %75 : vector<128x8xf32>
    %cst_31 = arith.constant dense<0xFF800000> : vector<128xf32>
    %77 = vector.multi_reduction <maximumf>, %66, %cst_31 [1] : vector<128x8xf32> to vector<128xf32>
    %78 = vector.shape_cast %77 : vector<128xf32> to vector<128x1xf32>
    %79 = vector.broadcast %78 : vector<128x1xf32> to vector<128x8xf32>
    %80 = arith.subf %66, %79 : vector<128x8xf32>
    %81 = math.exp %80 : vector<128x8xf32>
    %cst_32 = arith.constant dense<0.000000e+00> : vector<128xf32>
    %82 = vector.multi_reduction <add>, %81, %cst_32 [1] : vector<128x8xf32> to vector<128xf32>
    %83 = vector.shape_cast %82 : vector<128xf32> to vector<128x1xf32>
    %84 = math.log %83 : vector<128x1xf32>
    %85 = vector.broadcast %84 : vector<128x1xf32> to vector<128x8xf32>
    %86 = arith.subf %80, %85 : vector<128x8xf32>
    %87 = tpu.concatenate %76, %86 in 1 : vector<128x8xf32>, vector<128x8xf32> -> vector<128x16xf32>
    %c0_33 = arith.constant 0 : index
    %c0_34 = arith.constant 0 : index
    %88 = vector.load %arg10[%c0_33, %c0_34] : memref<128x16xf32, #tpu.memory_space<vmem>>, vector<128x16xf32>
    tpu.vector_store %arg10[%c0_33, %c0_34], %87 {strides = array<i32>} : memref<128x16xf32, #tpu.memory_space<vmem>>, vector<128x16xf32>,
    return
  }
  func.func @transform_0(%arg0: i32) -> (i32, i32) {
    %c0_i32 = arith.constant 0 : i32
    %c0_i32_0 = arith.constant 0 : i32
    %c0_i32_1 = arith.constant 0 : i32
    return %c0_i32, %c0_i32_0 : i32, i32
  }
  func.func @transform_1(%arg0: i32) -> (i32, i32) {
    %c0_i32 = arith.constant 0 : i32
    %c0_i32_0 = arith.constant 0 : i32
    %c0_i32_1 = arith.constant 0 : i32
    return %c0_i32, %c0_i32_0 : i32, i32
  }
  func.func @transform_2(%arg0: i32) -> (i32, i32) {
    %c0_i32 = arith.constant 0 : i32
    %c0_i32_0 = arith.constant 0 : i32
    %c0_i32_1 = arith.constant 0 : i32
    return %c0_i32, %c0_i32_0 : i32, i32
  }
  func.func @transform_3(%arg0: i32) -> (i32, i32) {
    %c0_i32 = arith.constant 0 : i32
    %c0_i32_0 = arith.constant 0 : i32
    %c0_i32_1 = arith.constant 0 : i32
    return %c0_i32, %c0_i32_0 : i32, i32
  }
  func.func @transform_4(%arg0: i32) -> (i32, i32) {
    %c0_i32 = arith.constant 0 : i32
    %c0_i32_0 = arith.constant 0 : i32
    %c0_i32_1 = arith.constant 0 : i32
    return %c0_i32, %c0_i32_0 : i32, i32
  }
  func.func @transform_5(%arg0: i32) -> (i32, i32) {
    %c0_i32 = arith.constant 0 : i32
    %c0_i32_0 = arith.constant 0 : i32
    %c0_i32_1 = arith.constant 0 : i32
    return %c0_i32, %c0_i32_0 : i32, i32
  }
  func.func @transform_6(%arg0: i32) -> (i32, i32) {
    %c0_i32 = arith.constant 0 : i32
    %c0_i32_0 = arith.constant 0 : i32
    %c0_i32_1 = arith.constant 0 : i32
    return %c0_i32, %c0_i32_0 : i32, i32
  }
  func.func @transform_7(%arg0: i32) -> (i32, i32) {
    %c0_i32 = arith.constant 0 : i32
    %c0_i32_0 = arith.constant 0 : i32
    %c0_i32_1 = arith.constant 0 : i32
    return %c0_i32, %c0_i32_0 : i32, i32
  }
  func.func @transform_8(%arg0: i32) -> (i32, i32) {
    %c0_i32 = arith.constant 0 : i32
    %c0_i32_0 = arith.constant 0 : i32
    %c0_i32_1 = arith.constant 0 : i32
    return %c0_i32, %c0_i32_0 : i32, i32
  }
  func.func @transform_9(%arg0: i32) -> (i32, i32) {
    %c0_i32 = arith.constant 0 : i32
    %c0_i32_0 = arith.constant 0 : i32
    %c0_i32_1 = arith.constant 0 : i32
    return %c0_i32, %c0_i32_0 : i32, i32
  }
}

</mosaic_0001>

<llo_original>
// kernel: lpa_gcn_model.1
$region0: #{lpa_gcn_model.1}
  #allocation0 [shape = 'u32[]', space=smem, size = 0x4, offset = 0x4, fixed_abs, tag = 'smem constant byte address 0x4 - core index']
  #allocation1 [shape = 'u32[144,128]{1,0:T(1,128)}', space=vmem, size = 0x12000, scoped, tag = 'internal scratch']
  %s0 = inlined_call_operand.vmem [shape: f32[128,32], index: 0, kind: input, shape index: {}]
  %s1 = inlined_call_operand.vmem [shape: f32[128,128], index: 1, kind: input, shape index: {}]
  %s2 = inlined_call_operand.vmem [shape: f32[128,8], index: 2, kind: input, shape index: {}]
  %s3 = inlined_call_operand.vmem [shape: f32[32,32], index: 3, kind: input, shape index: {}]
  %s4 = inlined_call_operand.vmem [shape: f32[1,32], index: 4, kind: input, shape index: {}]
  %s5 = inlined_call_operand.vmem [shape: f32[128,128], index: 5, kind: input, shape index: {}]
  %s6 = inlined_call_operand.vmem [shape: f32[32,8], index: 6, kind: input, shape index: {}]
  %s7 = inlined_call_operand.vmem [shape: f32[1,8], index: 7, kind: input, shape index: {}]
  %s8 = inlined_call_operand.hbm [shape: f32[128,128], index: 8, kind: input, shape index: {}]
  %s9 = inlined_call_operand.vmem [shape: f32[128,16], index: 9, kind: output, shape index: {}]
  %s10 = sld [smem:[#allocation0]]
  $region50: #{lpa_gcn_model.1} parent=0
    _
  %s12 = ssub.s32 1, %s10
  %s13 = scalar_select 0, %s12, %s10
  $region1: #{lpa_gcn_model.1} parent=0
    #allocation2 [shape = 'u8[65536]{0}', space=vmem, size = 0x10000, scoped, tag = 'input window, operand 8, single buffered']
    #allocation3 [shape = 's32[1]{0}', space=sflag, size = 0x4, scoped, tag = 'scoped memory for lpa_gcn_model.1']
    %14 = vsyncpa [#allocation3], 0
    // Predicated region
    $region2: #{lpa_gcn_model.1} parent=1 // pred_check
      _
    $region3: #{lpa_gcn_model.1} parent=1 // pred_check_branch
      %16 = sbr.rel (0) target = $region5
    $region4: #{lpa_gcn_model.1} parent=1 // pred_region
      _
    $region5: #{lpa_gcn_model.1} parent=1 // pred_fallthru
      _
    // Predicated region
    $region6: #{lpa_gcn_model.1} parent=1 // pred_check
      _
    $region7: #{lpa_gcn_model.1} parent=1 // pred_check_branch
      %18 = sbr.rel (0) target = $region9
    $region8: #{lpa_gcn_model.1} parent=1 // pred_region
      _
    $region9: #{lpa_gcn_model.1} parent=1 // pred_fallthru
      _
    // Predicated region
    $region10: #{lpa_gcn_model.1} parent=1 // pred_check
      _
    $region11: #{lpa_gcn_model.1} parent=1 // pred_check_branch
      %20 = sbr.rel (0) target = $region13
    $region12: #{lpa_gcn_model.1} parent=1 // pred_region
      _
    $region13: #{lpa_gcn_model.1} parent=1 // pred_fallthru
      _
    // Predicated region
    $region14: #{lpa_gcn_model.1} parent=1 // pred_check
      _
    $region15: #{lpa_gcn_model.1} parent=1 // pred_check_branch
      %22 = sbr.rel (0) target = $region17
    $region16: #{lpa_gcn_model.1} parent=1 // pred_region
      _
    $region17: #{lpa_gcn_model.1} parent=1 // pred_fallthru
      _
    // Predicated region
    $region18: #{lpa_gcn_model.1} parent=1 // pred_check
      _
    $region19: #{lpa_gcn_model.1} parent=1 // pred_check_branch
      %24 = sbr.rel (0) target = $region21
    $region20: #{lpa_gcn_model.1} parent=1 // pred_region
      _
    $region21: #{lpa_gcn_model.1} parent=1 // pred_fallthru
      _
    // Predicated region
    $region22: #{lpa_gcn_model.1} parent=1 // pred_check
      _
    $region23: #{lpa_gcn_model.1} parent=1 // pred_check_branch
      %26 = sbr.rel (0) target = $region25
    $region24: #{lpa_gcn_model.1} parent=1 // pred_region
      _
    $region25: #{lpa_gcn_model.1} parent=1 // pred_fallthru
      _
    // Predicated region
    $region26: #{lpa_gcn_model.1} parent=1 // pred_check
      _
    $region27: #{lpa_gcn_model.1} parent=1 // pred_check_branch
      %28 = sbr.rel (0) target = $region29
    $region28: #{lpa_gcn_model.1} parent=1 // pred_region
      _
    $region29: #{lpa_gcn_model.1} parent=1 // pred_fallthru
      _
    // Predicated region
    $region30: #{lpa_gcn_model.1} parent=1 // pred_check
      _
    $region31: #{lpa_gcn_model.1} parent=1 // pred_check_branch
      %30 = sbr.rel (0) target = $region33
    $region32: #{lpa_gcn_model.1} parent=1 // pred_region
      _
    $region33: #{lpa_gcn_model.1} parent=1 // pred_fallthru
      _
    // Predicated region
    $region34: #{lpa_gcn_model.1} parent=1 // pred_check
      _
    $region35: #{lpa_gcn_model.1} parent=1 // pred_check_branch
      %32 = sbr.rel (0) target = $region37
    $region36: #{lpa_gcn_model.1} parent=1 // pred_region
      %s34 = ssub.s32 2048, 2048
      %35 = vsyncadd [#allocation3], %s34
      %s36 = sshll.u32 [#allocation2], 4
      %s37 = int_to_ptr.vmem [resolvable:$true] %s36
      %42 = dma.hbm_to_vmem [thread:$0]  %s8, 2048, %s37, [#allocation3], 128, 128, 8
    $region37: #{lpa_gcn_model.1} parent=1 // pred_fallthru
      _
    // Predicated region
    $region38: #{lpa_gcn_model.1} parent=1 // pred_check
      _
    $region39: #{lpa_gcn_model.1} parent=1 // pred_check_branch
      %44 = sbr.rel (0) target = $region41
    $region40: #{lpa_gcn_model.1} parent=1 // pred_region
      %45 = dma.done [#allocation3], 2048
    $region41: #{lpa_gcn_model.1} parent=1 // pred_fallthru
      _
    %v47 = vld [vmem:[%s1] sm:$0xff]
    %v48 = vld [vmem:[%s1 + $0x8] sm:$0xff]
    %v49 = vld [vmem:[%s1 + $0x10] sm:$0xff]
    %v50 = vld [vmem:[%s1 + $0x18] sm:$0xff]
    %v51 = vld [vmem:[%s1 + $0x20] sm:$0xff]
    %v52 = vld [vmem:[%s1 + $0x28] sm:$0xff]
    %v53 = vld [vmem:[%s1 + $0x30] sm:$0xff]
    %v54 = vld [vmem:[%s1 + $0x38] sm:$0xff]
    %v55 = vld [vmem:[%s1 + $0x40] sm:$0xff]
    %v56 = vld [vmem:[%s1 + $0x48] sm:$0xff]
    %v57 = vld [vmem:[%s1 + $0x50] sm:$0xff]
    %v58 = vld [vmem:[%s1 + $0x58] sm:$0xff]
    %v59 = vld [vmem:[%s1 + $0x60] sm:$0xff]
    %v60 = vld [vmem:[%s1 + $0x68] sm:$0xff]
    %v61 = vld [vmem:[%s1 + $0x70] sm:$0xff]
    %v62 = vld [vmem:[%s1 + $0x78] sm:$0xff]
    %v63 = vld [vmem:[%s5] sm:$0xff]
    %v64 = vld [vmem:[%s5 + $0x8] sm:$0xff]
    %v65 = vld [vmem:[%s5 + $0x10] sm:$0xff]
    %v66 = vld [vmem:[%s5 + $0x18] sm:$0xff]
    %v67 = vld [vmem:[%s5 + $0x20] sm:$0xff]
    %v68 = vld [vmem:[%s5 + $0x28] sm:$0xff]
    %v69 = vld [vmem:[%s5 + $0x30] sm:$0xff]
    %v70 = vld [vmem:[%s5 + $0x38] sm:$0xff]
    %v71 = vld [vmem:[%s5 + $0x40] sm:$0xff]
    %v72 = vld [vmem:[%s5 + $0x48] sm:$0xff]
    %v73 = vld [vmem:[%s5 + $0x50] sm:$0xff]
    %v74 = vld [vmem:[%s5 + $0x58] sm:$0xff]
    %v75 = vld [vmem:[%s5 + $0x60] sm:$0xff]
    %v76 = vld [vmem:[%s5 + $0x68] sm:$0xff]
    %v77 = vld [vmem:[%s5 + $0x70] sm:$0xff]
    %v78 = vld [vmem:[%s5 + $0x78] sm:$0xff]
    %v79 = vmul.f32 %v47, %v63
    %v80 = vmul.f32 %v48, %v64
    %v81 = vmul.f32 %v49, %v65
    %v82 = vmul.f32 %v50, %v66
    %v83 = vmul.f32 %v51, %v67
    %v84 = vmul.f32 %v52, %v68
    %v85 = vmul.f32 %v53, %v69
    %v86 = vmul.f32 %v54, %v70
    %v87 = vmul.f32 %v55, %v71
    %v88 = vmul.f32 %v56, %v72
    %v89 = vmul.f32 %v57, %v73
    %v90 = vmul.f32 %v58, %v74
    %v91 = vmul.f32 %v59, %v75
    %v92 = vmul.f32 %v60, %v76
    %v93 = vmul.f32 %v61, %v77
    %v94 = vmul.f32 %v62, %v78
    %v95 = vand.u32 2147483647, %v79
    %v96 = vand.u32 2147483647, %v80
    %v97 = vand.u32 2147483647, %v81
    %v98 = vand.u32 2147483647, %v82
    %v99 = vand.u32 2147483647, %v83
    %v100 = vand.u32 2147483647, %v84
    %v101 = vand.u32 2147483647, %v85
    %v102 = vand.u32 2147483647, %v86
    %v103 = vand.u32 2147483647, %v87
    %v104 = vand.u32 2147483647, %v88
    %v105 = vand.u32 2147483647, %v89
    %v106 = vand.u32 2147483647, %v90
    %v107 = vand.u32 2147483647, %v91
    %v108 = vand.u32 2147483647, %v92
    %v109 = vand.u32 2147483647, %v93
    %v110 = vand.u32 2147483647, %v94
    %111 = vadd.xlane.f32.xlu0 %v95
    %v112 = vpop.xlane.xlu0 %111
    %113 = vadd.xlane.f32.xlu0 %v96
    %v114 = vpop.xlane.xlu0 %113
    %115 = vadd.xlane.f32.xlu0 %v97
    %v116 = vpop.xlane.xlu0 %115
    %117 = vadd.xlane.f32.xlu0 %v98
    %v118 = vpop.xlane.xlu0 %117
    %119 = vadd.xlane.f32.xlu0 %v99
    %v120 = vpop.xlane.xlu0 %119
    %121 = vadd.xlane.f32.xlu0 %v100
    %v122 = vpop.xlane.xlu0 %121
    %123 = vadd.xlane.f32.xlu0 %v101
    %v124 = vpop.xlane.xlu0 %123
    %125 = vadd.xlane.f32.xlu0 %v102
    %v126 = vpop.xlane.xlu0 %125
    %127 = vadd.xlane.f32.xlu0 %v103
    %v128 = vpop.xlane.xlu0 %127
    %129 = vadd.xlane.f32.xlu0 %v104
    %v130 = vpop.xlane.xlu0 %129
    %131 = vadd.xlane.f32.xlu0 %v105
    %v132 = vpop.xlane.xlu0 %131
    %133 = vadd.xlane.f32.xlu0 %v106
    %v134 = vpop.xlane.xlu0 %133
    %135 = vadd.xlane.f32.xlu0 %v107
    %v136 = vpop.xlane.xlu0 %135
    %137 = vadd.xlane.f32.xlu0 %v108
    %v138 = vpop.xlane.xlu0 %137
    %139 = vadd.xlane.f32.xlu0 %v109
    %v140 = vpop.xlane.xlu0 %139
    %141 = vadd.xlane.f32.xlu0 %v110
    %v142 = vpop.xlane.xlu0 %141
    %v143 = vmax.f32 %v112, 1e-12
    %v144 = vmax.f32 %v114, 1e-12
    %v145 = vmax.f32 %v116, 1e-12
    %v146 = vmax.f32 %v118, 1e-12
    %v147 = vmax.f32 %v120, 1e-12
    %v148 = vmax.f32 %v122, 1e-12
    %v149 = vmax.f32 %v124, 1e-12
    %v150 = vmax.f32 %v126, 1e-12
    %v151 = vmax.f32 %v128, 1e-12
    %v152 = vmax.f32 %v130, 1e-12
    %v153 = vmax.f32 %v132, 1e-12
    %v154 = vmax.f32 %v134, 1e-12
    %v155 = vmax.f32 %v136, 1e-12
    %v156 = vmax.f32 %v138, 1e-12
    %v157 = vmax.f32 %v140, 1e-12
    %v158 = vmax.f32 %v142, 1e-12
    %v159 = vrcp.pop %v143
    %v160 = vrcp.pop %v144
    %v161 = vrcp.pop %v145
    %v162 = vrcp.pop %v146
    %v163 = vrcp.pop %v147
    %v164 = vrcp.pop %v148
    %v165 = vrcp.pop %v149
    %v166 = vrcp.pop %v150
    %v167 = vrcp.pop %v151
    %v168 = vrcp.pop %v152
    %v169 = vrcp.pop %v153
    %v170 = vrcp.pop %v154
    %v171 = vrcp.pop %v155
    %v172 = vrcp.pop %v156
    %v173 = vrcp.pop %v157
    %v174 = vrcp.pop %v158
    %v175 = vmul.f32 %v143, %v159
    %v176 = vmul.f32 %v144, %v160
    %v177 = vmul.f32 %v145, %v161
    %v178 = vmul.f32 %v146, %v162
    %v179 = vmul.f32 %v147, %v163
    %v180 = vmul.f32 %v148, %v164
    %v181 = vmul.f32 %v149, %v165
    %v182 = vmul.f32 %v150, %v166
    %v183 = vmul.f32 %v151, %v167
    %v184 = vmul.f32 %v152, %v168
    %v185 = vmul.f32 %v153, %v169
    %v186 = vmul.f32 %v154, %v170
    %v187 = vmul.f32 %v155, %v171
    %v188 = vmul.f32 %v156, %v172
    %v189 = vmul.f32 %v157, %v173
    %v190 = vmul.f32 %v158, %v174
    %v191 = vsub.f32 2.0, %v175
    %v192 = vsub.f32 2.0, %v176
    %v193 = vsub.f32 2.0, %v177
    %v194 = vsub.f32 2.0, %v178
    %v195 = vsub.f32 2.0, %v179
    %v196 = vsub.f32 2.0, %v180
    %v197 = vsub.f32 2.0, %v181
    %v198 = vsub.f32 2.0, %v182
    %v199 = vsub.f32 2.0, %v183
    %v200 = vsub.f32 2.0, %v184
    %v201 = vsub.f32 2.0, %v185
    %v202 = vsub.f32 2.0, %v186
    %v203 = vsub.f32 2.0, %v187
    %v204 = vsub.f32 2.0, %v188
    %v205 = vsub.f32 2.0, %v189
    %v206 = vsub.f32 2.0, %v190
    %v207 = vmul.f32 %v159, %v191
    %v208 = vmul.f32 %v160, %v192
    %v209 = vmul.f32 %v161, %v193
    %v210 = vmul.f32 %v162, %v194
    %v211 = vmul.f32 %v163, %v195
    %v212 = vmul.f32 %v164, %v196
    %v213 = vmul.f32 %v165, %v197
    %v214 = vmul.f32 %v166, %v198
    %v215 = vmul.f32 %v167, %v199
    %v216 = vmul.f32 %v168, %v200
    %v217 = vmul.f32 %v169, %v201
    %v218 = vmul.f32 %v170, %v202
    %v219 = vmul.f32 %v171, %v203
    %v220 = vmul.f32 %v172, %v204
    %v221 = vmul.f32 %v173, %v205
    %v222 = vmul.f32 %v174, %v206
    %v223 = vpack.c.bf16 %v80, %v79
    %v224 = vpack.c.bf16 %v82, %v81
    %v225 = vpack.c.bf16 %v84, %v83
    %v226 = vpack.c.bf16 %v86, %v85
    %v227 = vpack.c.bf16 %v88, %v87
    %v228 = vpack.c.bf16 %v90, %v89
    %v229 = vpack.c.bf16 %v92, %v91
    %v230 = vpack.c.bf16 %v94, %v93
    %v231 = vld [vmem:[%s0] sm:$0xff]
    %v232 = vld [vmem:[%s0 + $0x8] sm:$0xff]
    %v233 = vld [vmem:[%s0 + $0x10] sm:$0xff]
    %v234 = vld [vmem:[%s0 + $0x18] sm:$0xff]
    %v235 = vld [vmem:[%s0 + $0x20] sm:$0xff]
    %v236 = vld [vmem:[%s0 + $0x28] sm:$0xff]
    %v237 = vld [vmem:[%s0 + $0x30] sm:$0xff]
    %v238 = vld [vmem:[%s0 + $0x38] sm:$0xff]
    %v239 = vld [vmem:[%s0 + $0x40] sm:$0xff]
    %v240 = vld [vmem:[%s0 + $0x48] sm:$0xff]
    %v241 = vld [vmem:[%s0 + $0x50] sm:$0xff]
    %v242 = vld [vmem:[%s0 + $0x58] sm:$0xff]
    %v243 = vld [vmem:[%s0 + $0x60] sm:$0xff]
    %v244 = vld [vmem:[%s0 + $0x68] sm:$0xff]
    %v245 = vld [vmem:[%s0 + $0x70] sm:$0xff]
    %v246 = vld [vmem:[%s0 + $0x78] sm:$0xff]
    %v247 = vld [vmem:[%s2] sm:$0xff]
    %v248 = vld [vmem:[%s2 + $0x8] sm:$0xff]
    %v249 = vld [vmem:[%s2 + $0x10] sm:$0xff]
    %v250 = vld [vmem:[%s2 + $0x18] sm:$0xff]
    %v251 = vld [vmem:[%s2 + $0x20] sm:$0xff]
    %v252 = vld [vmem:[%s2 + $0x28] sm:$0xff]
    %v253 = vld [vmem:[%s2 + $0x30] sm:$0xff]
    %v254 = vld [vmem:[%s2 + $0x38] sm:$0xff]
    %v255 = vld [vmem:[%s2 + $0x40] sm:$0xff]
    %v256 = vld [vmem:[%s2 + $0x48] sm:$0xff]
    %v257 = vld [vmem:[%s2 + $0x50] sm:$0xff]
    %v258 = vld [vmem:[%s2 + $0x58] sm:$0xff]
    %v259 = vld [vmem:[%s2 + $0x60] sm:$0xff]
    %v260 = vld [vmem:[%s2 + $0x68] sm:$0xff]
    %v261 = vld [vmem:[%s2 + $0x70] sm:$0xff]
    %v262 = vld [vmem:[%s2 + $0x78] sm:$0xff]
    %v263 = vld [vmem:[%s3] sm:$0xff]
    %v264 = vld [vmem:[%s3 + $0x8] sm:$0xff]
    %v265 = vld [vmem:[%s3 + $0x10] sm:$0xff]
    %v266 = vld [vmem:[%s3 + $0x18] sm:$0xff]
    %v267 = vld [vmem:[%s4] sm:$0x1]
    %v268 = vpack.c.bf16 %v232, %v231
    %v269 = vpack.c.bf16 %v234, %v233
    %v270 = vpack.c.bf16 %v236, %v235
    %v271 = vpack.c.bf16 %v238, %v237
    %v272 = vpack.c.bf16 %v240, %v239
    %v273 = vpack.c.bf16 %v242, %v241
    %v274 = vpack.c.bf16 %v244, %v243
    %v275 = vpack.c.bf16 %v246, %v245
    %v276 = vpack.c.bf16 %v264, %v263
    %v277 = vpack.c.bf16 %v266, %v265
    %vm278 = vcmask 261120
    %v280 = vsel %vm278, %v268, 0
    %v283 = vsel %vm278, %v269, 0
    %v286 = vsel %vm278, %v270, 0
    %v289 = vsel %vm278, %v271, 0
    %v292 = vsel %vm278, %v272, 0
    %v295 = vsel %vm278, %v273, 0
    %v298 = vsel %vm278, %v274, 0
    %v301 = vsel %vm278, %v275, 0
    %303 = vmatprep.subr.bf16.mxu0 0
    %304 = vmatpush1.bf16.msra.mxu0 %v276
    %305 = vmatprep.subr.bf16.mxu0 0
    %306 = vmatpush1.bf16.msra.mxu0 %v277
    %307 = vmatprep.subr.bf16.mxu0 0
    %308 = vmatpush1.bf16.msra.mxu0 0
    %309 = vmatprep.subr.bf16.mxu0 0
    %310 = vmatpush1.bf16.msra.mxu0 0
    %311 = vmatprep.subr.bf16.mxu0 0
    %312 = vmatpush1.bf16.msra.mxu0 0
    %313 = vmatprep.subr.bf16.mxu0 0
    %314 = vmatpush1.bf16.msra.mxu0 0
    %315 = vmatprep.subr.bf16.mxu0 0
    %316 = vmatpush1.bf16.msra.mxu0 0
    %317 = vmatprep.subr.bf16.mxu0 0
    %318 = vmatpush1.bf16.msra.mxu0 0
    %319 = vmatprep.subr.bf16.mxu0 0
    %320 = vmatpush1.bf16.msra.mxu0 0
    %321 = vmatprep.subr.bf16.mxu0 0
    %322 = vmatpush1.bf16.msra.mxu0 0
    %323 = vmatprep.subr.bf16.mxu0 0
    %324 = vmatpush1.bf16.msra.mxu0 0
    %325 = vmatprep.subr.bf16.mxu0 0
    %326 = vmatpush1.bf16.msra.mxu0 0
    %327 = vmatprep.subr.bf16.mxu0 0
    %328 = vmatpush1.bf16.msra.mxu0 0
    %329 = vmatprep.subr.bf16.mxu0 0
    %330 = vmatpush1.bf16.msra.mxu0 0
    %331 = vmatprep.subr.bf16.mxu0 0
    %332 = vmatpush1.bf16.msra.mxu0 0
    %333 = vmatprep.subr.bf16.mxu0 0
    %334 = vmatpush1.bf16.msra.mxu0 0
    %335 = vmatprep.mubr.bf16.mxu0 0
    %336 = vmatmul.mubr.bf16.gmra.mrb[0].mxu0 %v280
    %v337 = vpop.f32.mrb[0].mxu0
    %v338 = vadd.f32 0.0, %v337
    %v339 = vpop.f32.mrb[0].mxu0
    %v340 = vpop.f32.mrb[0].mxu0
    %v341 = vadd.f32 0.0, %v340
    %v342 = vpop.f32.mrb[0].mxu0
    %343 = vmatprep.mubr.bf16.mxu0 0
    %344 = vmatmul.mubr.bf16.gmra.mrb[0].mxu0 %v283
    %v345 = vpop.f32.mrb[0].mxu0
    %v346 = vadd.f32 0.0, %v345
    %v347 = vpop.f32.mrb[0].mxu0
    %v348 = vpop.f32.mrb[0].mxu0
    %v349 = vadd.f32 0.0, %v348
    %v350 = vpop.f32.mrb[0].mxu0
    %351 = vmatprep.mubr.bf16.mxu0 0
    %352 = vmatmul.mubr.bf16.gmra.mrb[0].mxu0 %v286
    %v353 = vpop.f32.mrb[0].mxu0
    %v354 = vadd.f32 0.0, %v353
    %v355 = vpop.f32.mrb[0].mxu0
    %v356 = vpop.f32.mrb[0].mxu0
    %v357 = vadd.f32 0.0, %v356
    %v358 = vpop.f32.mrb[0].mxu0
    %359 = vmatprep.mubr.bf16.mxu0 0
    %360 = vmatmul.mubr.bf16.gmra.mrb[0].mxu0 %v289
    %v361 = vpop.f32.mrb[0].mxu0
    %v362 = vadd.f32 0.0, %v361
    %v363 = vpop.f32.mrb[0].mxu0
    %v364 = vpop.f32.mrb[0].mxu0
    %v365 = vadd.f32 0.0, %v364
    %v366 = vpop.f32.mrb[0].mxu0
    %367 = vmatprep.mubr.bf16.mxu0 0
    %368 = vmatmul.mubr.bf16.gmra.mrb[0].mxu0 %v292
    %v369 = vpop.f32.mrb[0].mxu0
    %v370 = vadd.f32 0.0, %v369
    %v371 = vpop.f32.mrb[0].mxu0
    %v372 = vpop.f32.mrb[0].mxu0
    %v373 = vadd.f32 0.0, %v372
    %v374 = vpop.f32.mrb[0].mxu0
    %375 = vmatprep.mubr.bf16.mxu0 0
    %376 = vmatmul.mubr.bf16.gmra.mrb[0].mxu0 %v295
    %v377 = vpop.f32.mrb[0].mxu0
    %v378 = vadd.f32 0.0, %v377
    %v379 = vpop.f32.mrb[0].mxu0
    %v380 = vpop.f32.mrb[0].mxu0
    %v381 = vadd.f32 0.0, %v380
    %v382 = vpop.f32.mrb[0].mxu0
    %383 = vmatprep.mubr.bf16.mxu0 0
    %384 = vmatmul.mubr.bf16.gmra.mrb[0].mxu0 %v298
    %v385 = vpop.f32.mrb[0].mxu0
    %v386 = vadd.f32 0.0, %v385
    %v387 = vpop.f32.mrb[0].mxu0
    %v388 = vpop.f32.mrb[0].mxu0
    %v389 = vadd.f32 0.0, %v388
    %v390 = vpop.f32.mrb[0].mxu0
    %391 = vmatprep.mubr.bf16.mxu0 0
    %392 = vmatmul.mubr.bf16.gmra.mrb[0].mxu0 %v301
    %v393 = vpop.f32.mrb[0].mxu0
    %v394 = vadd.f32 0.0, %v393
    %v395 = vpop.f32.mrb[0].mxu0
    %v396 = vpop.f32.mrb[0].mxu0
    %v397 = vadd.f32 0.0, %v396
    %v398 = vpop.f32.mrb[0].mxu0
    %399 = vdwg.mxu0
    %v400 = vpack.c.bf16 %v248, %v247
    %v401 = vpack.c.bf16 %v250, %v249
    %v402 = vpack.c.bf16 %v252, %v251
    %v403 = vpack.c.bf16 %v254, %v253
    %v404 = vpack.c.bf16 %v256, %v255
    %v405 = vpack.c.bf16 %v258, %v257
    %v406 = vpack.c.bf16 %v260, %v259
    %v407 = vpack.c.bf16 %v262, %v261
    %408 = vmatprep.subr.bf16.mxu0 0
    %409 = vmatpush1.bf16.msra.mxu0 %v400
    %410 = vmatprep.subr.bf16.mxu0 0
    %411 = vmatpush1.bf16.msra.mxu0 %v401
    %412 = vmatprep.subr.bf16.mxu0 0
    %413 = vmatpush1.bf16.msra.mxu0 %v402
    %414 = vmatprep.subr.bf16.mxu0 0
    %415 = vmatpush1.bf16.msra.mxu0 %v403
    %416 = vmatprep.subr.bf16.mxu0 0
    %417 = vmatpush1.bf16.msra.mxu0 %v404
    %418 = vmatprep.subr.bf16.mxu0 0
    %419 = vmatpush1.bf16.msra.mxu0 %v405
    %420 = vmatprep.subr.bf16.mxu0 0
    %421 = vmatpush1.bf16.msra.mxu0 %v406
    %422 = vmatprep.subr.bf16.mxu0 0
    %423 = vmatpush1.bf16.msra.mxu0 %v407
    %424 = vmatprep.subr.bf16.mxu0 0
    %425 = vmatpush1.bf16.msra.mxu0 0
    %426 = vmatprep.subr.bf16.mxu0 0
    %427 = vmatpush1.bf16.msra.mxu0 0
    %428 = vmatprep.subr.bf16.mxu0 0
    %429 = vmatpush1.bf16.msra.mxu0 0
    %430 = vmatprep.subr.bf16.mxu0 0
    %431 = vmatpush1.bf16.msra.mxu0 0
    %432 = vmatprep.subr.bf16.mxu0 0
    %433 = vmatpush1.bf16.msra.mxu0 0
    %434 = vmatprep.subr.bf16.mxu0 0
    %435 = vmatpush1.bf16.msra.mxu0 0
    %436 = vmatprep.subr.bf16.mxu0 0
    %437 = vmatpush1.bf16.msra.mxu0 0
    %438 = vmatprep.subr.bf16.mxu0 0
    %439 = vmatpush1.bf16.msra.mxu0 0
    %440 = vmatprep.mubr.bf16.mxu0 0
    %441 = vmatmul.mubr.bf16.gmra.mrb[0].mxu0 %v223
    %v442 = vpop.f32.mrb[0].mxu0
    %v443 = vadd.f32 0.0, %v442
    %v444 = vpop.f32.mrb[0].mxu0
    %v445 = vpop.f32.mrb[0].mxu0
    %v446 = vadd.f32 0.0, %v445
    %v447 = vpop.f32.mrb[0].mxu0
    %448 = vmatprep.mubr.bf16.mxu0 0
    %449 = vmatmul.mubr.bf16.gmra.mrb[0].mxu0 %v224
    %v450 = vpop.f32.mrb[0].mxu0
    %v451 = vadd.f32 0.0, %v450
    %v452 = vpop.f32.mrb[0].mxu0
    %v453 = vpop.f32.mrb[0].mxu0
    %v454 = vadd.f32 0.0, %v453
    %v455 = vpop.f32.mrb[0].mxu0
    %456 = vmatprep.mubr.bf16.mxu0 0
    %457 = vmatmul.mubr.bf16.gmra.mrb[0].mxu0 %v225
    %v458 = vpop.f32.mrb[0].mxu0
    %v459 = vadd.f32 0.0, %v458
    %v460 = vpop.f32.mrb[0].mxu0
    %v461 = vpop.f32.mrb[0].mxu0
    %v462 = vadd.f32 0.0, %v461
    %v463 = vpop.f32.mrb[0].mxu0
    %464 = vmatprep.mubr.bf16.mxu0 0
    %465 = vmatmul.mubr.bf16.gmra.mrb[0].mxu0 %v226
    %v466 = vpop.f32.mrb[0].mxu0
    %v467 = vadd.f32 0.0, %v466
    %v468 = vpop.f32.mrb[0].mxu0
    %v469 = vpop.f32.mrb[0].mxu0
    %v470 = vadd.f32 0.0, %v469
    %v471 = vpop.f32.mrb[0].mxu0
    %472 = vmatprep.mubr.bf16.mxu0 0
    %473 = vmatmul.mubr.bf16.gmra.mrb[0].mxu0 %v227
    %v474 = vpop.f32.mrb[0].mxu0
    %v475 = vadd.f32 0.0, %v474
    %v476 = vpop.f32.mrb[0].mxu0
    %v477 = vpop.f32.mrb[0].mxu0
    %v478 = vadd.f32 0.0, %v477
    %v479 = vpop.f32.mrb[0].mxu0
    %480 = vmatprep.mubr.bf16.mxu0 0
    %481 = vmatmul.mubr.bf16.gmra.mrb[0].mxu0 %v228
    %v482 = vpop.f32.mrb[0].mxu0
    %v483 = vadd.f32 0.0, %v482
    %v484 = vpop.f32.mrb[0].mxu0
    %v485 = vpop.f32.mrb[0].mxu0
    %v486 = vadd.f32 0.0, %v485
    %v487 = vpop.f32.mrb[0].mxu0
    %488 = vmatprep.mubr.bf16.mxu0 0
    %489 = vmatmul.mubr.bf16.gmra.mrb[0].mxu0 %v229
    %v490 = vpop.f32.mrb[0].mxu0
    %v491 = vadd.f32 0.0, %v490
    %v492 = vpop.f32.mrb[0].mxu0
    %v493 = vpop.f32.mrb[0].mxu0
    %v494 = vadd.f32 0.0, %v493
    %v495 = vpop.f32.mrb[0].mxu0
    %496 = vmatprep.mubr.bf16.mxu0 0
    %497 = vmatmul.mubr.bf16.gmra.mrb[0].mxu0 %v230
    %v498 = vpop.f32.mrb[0].mxu0
    %v499 = vadd.f32 0.0, %v498
    %v500 = vpop.f32.mrb[0].mxu0
    %v501 = vpop.f32.mrb[0].mxu0
    %v502 = vadd.f32 0.0, %v501
    %v503 = vpop.f32.mrb[0].mxu0
    %504 = vdwg.mxu0
    %v505 = vmul.f32 %v207, %v443
    %v506 = vmul.f32 %v208, %v446
    %v507 = vmul.f32 %v209, %v451
    %v508 = vmul.f32 %v210, %v454
    %v509 = vmul.f32 %v211, %v459
    %v510 = vmul.f32 %v212, %v462
    %v511 = vmul.f32 %v213, %v467
    %v512 = vmul.f32 %v214, %v470
    %v513 = vmul.f32 %v215, %v475
    %v514 = vmul.f32 %v216, %v478
    %v515 = vmul.f32 %v217, %v483
    %v516 = vmul.f32 %v218, %v486
    %v517 = vmul.f32 %v219, %v491
    %v518 = vmul.f32 %v220, %v494
    %v519 = vmul.f32 %v221, %v499
    %v520 = vmul.f32 %v222, %v502
    %537 = vrot.lane.b32.xlu0 %v505, 32
    %v538 = vpop.permute.xlu0 %537
    %539 = vrot.lane.b32.xlu0 %v506, 32
    %v540 = vpop.permute.xlu0 %539
    %541 = vrot.lane.b32.xlu0 %v507, 32
    %v542 = vpop.permute.xlu0 %541
    %543 = vrot.lane.b32.xlu0 %v508, 32
    %v544 = vpop.permute.xlu0 %543
    %545 = vrot.lane.b32.xlu0 %v509, 32
    %v546 = vpop.permute.xlu0 %545
    %547 = vrot.lane.b32.xlu0 %v510, 32
    %v548 = vpop.permute.xlu0 %547
    %549 = vrot.lane.b32.xlu0 %v511, 32
    %v550 = vpop.permute.xlu0 %549
    %551 = vrot.lane.b32.xlu0 %v512, 32
    %v552 = vpop.permute.xlu0 %551
    %553 = vrot.lane.b32.xlu0 %v513, 32
    %v554 = vpop.permute.xlu0 %553
    %555 = vrot.lane.b32.xlu0 %v514, 32
    %v556 = vpop.permute.xlu0 %555
    %557 = vrot.lane.b32.xlu0 %v515, 32
    %v558 = vpop.permute.xlu0 %557
    %559 = vrot.lane.b32.xlu0 %v516, 32
    %v560 = vpop.permute.xlu0 %559
    %561 = vrot.lane.b32.xlu0 %v517, 32
    %v562 = vpop.permute.xlu0 %561
    %563 = vrot.lane.b32.xlu0 %v518, 32
    %v564 = vpop.permute.xlu0 %563
    %565 = vrot.lane.b32.xlu0 %v519, 32
    %v566 = vpop.permute.xlu0 %565
    %567 = vrot.lane.b32.xlu0 %v520, 32
    %v568 = vpop.permute.xlu0 %567
    %v585 = vsel %vm278, %v338, %v538
    %v586 = vsel %vm278, %v341, %v540
    %v587 = vsel %vm278, %v346, %v542
    %v588 = vsel %vm278, %v349, %v544
    %v589 = vsel %vm278, %v354, %v546
    %v590 = vsel %vm278, %v357, %v548
    %v591 = vsel %vm278, %v362, %v550
    %v592 = vsel %vm278, %v365, %v552
    %v593 = vsel %vm278, %v370, %v554
    %v594 = vsel %vm278, %v373, %v556
    %v595 = vsel %vm278, %v378, %v558
    %v596 = vsel %vm278, %v381, %v560
    %v597 = vsel %vm278, %v386, %v562
    %v598 = vsel %vm278, %v389, %v564
    %v599 = vsel %vm278, %v394, %v566
    %v600 = vsel %vm278, %v397, %v568
    %v601 = vpack.c.bf16 %v586, %v585
    %v602 = vpack.c.bf16 %v588, %v587
    %v603 = vpack.c.bf16 %v590, %v589
    %v604 = vpack.c.bf16 %v592, %v591
    %v605 = vpack.c.bf16 %v594, %v593
    %v606 = vpack.c.bf16 %v596, %v595
    %v607 = vpack.c.bf16 %v598, %v597
    %v608 = vpack.c.bf16 %v600, %v599
    %609 = vmatprep.subr.bf16.mxu0 0
    %610 = vmatpush1.bf16.msra.mxu0 %v601
    %611 = vmatprep.subr.bf16.mxu0 0
    %612 = vmatpush1.bf16.msra.mxu0 %v602
    %613 = vmatprep.subr.bf16.mxu0 0
    %614 = vmatpush1.bf16.msra.mxu0 %v603
    %615 = vmatprep.subr.bf16.mxu0 0
    %616 = vmatpush1.bf16.msra.mxu0 %v604
    %617 = vmatprep.subr.bf16.mxu0 0
    %618 = vmatpush1.bf16.msra.mxu0 %v605
    %619 = vmatprep.subr.bf16.mxu0 0
    %620 = vmatpush1.bf16.msra.mxu0 %v606
    %621 = vmatprep.subr.bf16.mxu0 0
    %622 = vmatpush1.bf16.msra.mxu0 %v607
    %623 = vmatprep.subr.bf16.mxu0 0
    %624 = vmatpush1.bf16.msra.mxu0 %v608
    %625 = vmatprep.subr.bf16.mxu0 0
    %626 = vmatpush1.bf16.msra.mxu0 0
    %627 = vmatprep.subr.bf16.mxu0 0
    %628 = vmatpush1.bf16.msra.mxu0 0
    %629 = vmatprep.subr.bf16.mxu0 0
    %630 = vmatpush1.bf16.msra.mxu0 0
    %631 = vmatprep.subr.bf16.mxu0 0
    %632 = vmatpush1.bf16.msra.mxu0 0
    %633 = vmatprep.subr.bf16.mxu0 0
    %634 = vmatpush1.bf16.msra.mxu0 0
    %635 = vmatprep.subr.bf16.mxu0 0
    %636 = vmatpush1.bf16.msra.mxu0 0
    %637 = vmatprep.subr.bf16.mxu0 0
    %638 = vmatpush1.bf16.msra.mxu0 0
    %639 = vmatprep.subr.bf16.mxu0 0
    %640 = vmatpush1.bf16.msra.mxu0 0
    %641 = vmatprep.mubr.bf16.mxu0 0
    %642 = vmatmul.mubr.bf16.gmra.mrb[0].mxu0 %v223
    %v643 = vpop.f32.mrb[0].mxu0
    %v644 = vadd.f32 0.0, %v643
    %v645 = vpop.f32.mrb[0].mxu0
    %v646 = vpop.f32.mrb[0].mxu0
    %v647 = vadd.f32 0.0, %v646
    %v648 = vpop.f32.mrb[0].mxu0
    %649 = vmatprep.mubr.bf16.mxu0 0
    %650 = vmatmul.mubr.bf16.gmra.mrb[0].mxu0 %v224
    %v651 = vpop.f32.mrb[0].mxu0
    %v652 = vadd.f32 0.0, %v651
    %v653 = vpop.f32.mrb[0].mxu0
    %v654 = vpop.f32.mrb[0].mxu0
    %v655 = vadd.f32 0.0, %v654
    %v656 = vpop.f32.mrb[0].mxu0
    %657 = vmatprep.mubr.bf16.mxu0 0
    %658 = vmatmul.mubr.bf16.gmra.mrb[0].mxu0 %v225
    %v659 = vpop.f32.mrb[0].mxu0
    %v660 = vadd.f32 0.0, %v659
    %v661 = vpop.f32.mrb[0].mxu0
    %v662 = vpop.f32.mrb[0].mxu0
    %v663 = vadd.f32 0.0, %v662
    %v664 = vpop.f32.mrb[0].mxu0
    %665 = vmatprep.mubr.bf16.mxu0 0
    %666 = vmatmul.mubr.bf16.gmra.mrb[0].mxu0 %v226
    %v667 = vpop.f32.mrb[0].mxu0
    %v668 = vadd.f32 0.0, %v667
    %v669 = vpop.f32.mrb[0].mxu0
    %v670 = vpop.f32.mrb[0].mxu0
    %v671 = vadd.f32 0.0, %v670
    %v672 = vpop.f32.mrb[0].mxu0
    %673 = vmatprep.mubr.bf16.mxu0 0
    %674 = vmatmul.mubr.bf16.gmra.mrb[0].mxu0 %v227
    %v675 = vpop.f32.mrb[0].mxu0
    %v676 = vadd.f32 0.0, %v675
    %v677 = vpop.f32.mrb[0].mxu0
    %v678 = vpop.f32.mrb[0].mxu0
    %v679 = vadd.f32 0.0, %v678
    %v680 = vpop.f32.mrb[0].mxu0
    %681 = vmatprep.mubr.bf16.mxu0 0
    %682 = vmatmul.mubr.bf16.gmra.mrb[0].mxu0 %v228
    %v683 = vpop.f32.mrb[0].mxu0
    %v684 = vadd.f32 0.0, %v683
    %v685 = vpop.f32.mrb[0].mxu0
    %v686 = vpop.f32.mrb[0].mxu0
    %v687 = vadd.f32 0.0, %v686
    %v688 = vpop.f32.mrb[0].mxu0
    %689 = vmatprep.mubr.bf16.mxu0 0
    %690 = vmatmul.mubr.bf16.gmra.mrb[0].mxu0 %v229
    %v691 = vpop.f32.mrb[0].mxu0
    %v692 = vadd.f32 0.0, %v691
    %v693 = vpop.f32.mrb[0].mxu0
    %v694 = vpop.f32.mrb[0].mxu0
    %v695 = vadd.f32 0.0, %v694
    %v696 = vpop.f32.mrb[0].mxu0
    %697 = vmatprep.mubr.bf16.mxu0 0
    %698 = vmatmul.mubr.bf16.gmra.mrb[0].mxu0 %v230
    %v699 = vpop.f32.mrb[0].mxu0
    %v700 = vadd.f32 0.0, %v699
    %v701 = vpop.f32.mrb[0].mxu0
    %v702 = vpop.f32.mrb[0].mxu0
    %v703 = vadd.f32 0.0, %v702
    %v704 = vpop.f32.mrb[0].mxu0
    %705 = vdwg.mxu0
    %v706 = vmul.f32 %v207, %v644
    %v707 = vmul.f32 %v208, %v647
    %v708 = vmul.f32 %v209, %v652
    %v709 = vmul.f32 %v210, %v655
    %v710 = vmul.f32 %v211, %v660
    %v711 = vmul.f32 %v212, %v663
    %v712 = vmul.f32 %v213, %v668
    %v713 = vmul.f32 %v214, %v671
    %v714 = vmul.f32 %v215, %v676
    %v715 = vmul.f32 %v216, %v679
    %v716 = vmul.f32 %v217, %v684
    %v717 = vmul.f32 %v218, %v687
    %v718 = vmul.f32 %v219, %v692
    %v719 = vmul.f32 %v220, %v695
    %v720 = vmul.f32 %v221, %v700
    %v721 = vmul.f32 %v222, %v703
    %v723 = vlaneseq
    %v724 = vshrl.u32 %v723, 7
    %v725 = vsub.s32 0, %v724
    %v726 = vrot.slane %v267, %v725
    %v728 = vadd.f32 %v706, %v726
    %v729 = vadd.f32 %v707, %v726
    %v730 = vadd.f32 %v708, %v726
    %v731 = vadd.f32 %v709, %v726
    %v732 = vadd.f32 %v710, %v726
    %v733 = vadd.f32 %v711, %v726
    %v734 = vadd.f32 %v712, %v726
    %v735 = vadd.f32 %v713, %v726
    %v736 = vadd.f32 %v714, %v726
    %v737 = vadd.f32 %v715, %v726
    %v738 = vadd.f32 %v716, %v726
    %v739 = vadd.f32 %v717, %v726
    %v740 = vadd.f32 %v718, %v726
    %v741 = vadd.f32 %v719, %v726
    %v742 = vadd.f32 %v720, %v726
    %v743 = vadd.f32 %v721, %v726
    %v744 = vmax.f32 %v728, 0.0
    %v745 = vmax.f32 %v729, 0.0
    %v746 = vmax.f32 %v730, 0.0
    %v747 = vmax.f32 %v731, 0.0
    %v748 = vmax.f32 %v732, 0.0
    %v749 = vmax.f32 %v733, 0.0
    %v750 = vmax.f32 %v734, 0.0
    %v751 = vmax.f32 %v735, 0.0
    %v752 = vmax.f32 %v736, 0.0
    %v753 = vmax.f32 %v737, 0.0
    %v754 = vmax.f32 %v738, 0.0
    %v755 = vmax.f32 %v739, 0.0
    %v756 = vmax.f32 %v740, 0.0
    %v757 = vmax.f32 %v741, 0.0
    %v758 = vmax.f32 %v742, 0.0
    %v759 = vmax.f32 %v743, 0.0
    %v760 = vld [vmem:[#allocation2] sm:$0xff]
    %v761 = vld [vmem:[#allocation2 + $0x8] sm:$0xff]
    %v762 = vld [vmem:[#allocation2 + $0x10] sm:$0xff]
    %v763 = vld [vmem:[#allocation2 + $0x18] sm:$0xff]
    %v764 = vld [vmem:[#allocation2 + $0x20] sm:$0xff]
    %v765 = vld [vmem:[#allocation2 + $0x28] sm:$0xff]
    %v766 = vld [vmem:[#allocation2 + $0x30] sm:$0xff]
    %v767 = vld [vmem:[#allocation2 + $0x38] sm:$0xff]
    %v768 = vld [vmem:[#allocation2 + $0x40] sm:$0xff]
    %v769 = vld [vmem:[#allocation2 + $0x48] sm:$0xff]
    %v770 = vld [vmem:[#allocation2 + $0x50] sm:$0xff]
    %v771 = vld [vmem:[#allocation2 + $0x58] sm:$0xff]
    %v772 = vld [vmem:[#allocation2 + $0x60] sm:$0xff]
    %v773 = vld [vmem:[#allocation2 + $0x68] sm:$0xff]
    %v774 = vld [vmem:[#allocation2 + $0x70] sm:$0xff]
    %v775 = vld [vmem:[#allocation2 + $0x78] sm:$0xff]
    %v776 = vmul.f32 %v47, %v760
    %v777 = vmul.f32 %v48, %v761
    %v778 = vmul.f32 %v49, %v762
    %v779 = vmul.f32 %v50, %v763
    %v780 = vmul.f32 %v51, %v764
    %v781 = vmul.f32 %v52, %v765
    %v782 = vmul.f32 %v53, %v766
    %v783 = vmul.f32 %v54, %v767
    %v784 = vmul.f32 %v55, %v768
    %v785 = vmul.f32 %v56, %v769
    %v786 = vmul.f32 %v57, %v770
    %v787 = vmul.f32 %v58, %v771
    %v788 = vmul.f32 %v59, %v772
    %v789 = vmul.f32 %v60, %v773
    %v790 = vmul.f32 %v61, %v774
    %v791 = vmul.f32 %v62, %v775
    %v792 = vand.u32 2147483647, %v776
    %v793 = vand.u32 2147483647, %v777
    %v794 = vand.u32 2147483647, %v778
    %v795 = vand.u32 2147483647, %v779
    %v796 = vand.u32 2147483647, %v780
    %v797 = vand.u32 2147483647, %v781
    %v798 = vand.u32 2147483647, %v782
    %v799 = vand.u32 2147483647, %v783
    %v800 = vand.u32 2147483647, %v784
    %v801 = vand.u32 2147483647, %v785
    %v802 = vand.u32 2147483647, %v786
    %v803 = vand.u32 2147483647, %v787
    %v804 = vand.u32 2147483647, %v788
    %v805 = vand.u32 2147483647, %v789
    %v806 = vand.u32 2147483647, %v790
    %v807 = vand.u32 2147483647, %v791
    %808 = vadd.xlane.f32.xlu0 %v792
    %v809 = vpop.xlane.xlu0 %808
    %810 = vadd.xlane.f32.xlu0 %v793
    %v811 = vpop.xlane.xlu0 %810
    %812 = vadd.xlane.f32.xlu0 %v794
    %v813 = vpop.xlane.xlu0 %812
    %814 = vadd.xlane.f32.xlu0 %v795
    %v815 = vpop.xlane.xlu0 %814
    %816 = vadd.xlane.f32.xlu0 %v796
    %v817 = vpop.xlane.xlu0 %816
    %818 = vadd.xlane.f32.xlu0 %v797
    %v819 = vpop.xlane.xlu0 %818
    %820 = vadd.xlane.f32.xlu0 %v798
    %v821 = vpop.xlane.xlu0 %820
    %822 = vadd.xlane.f32.xlu0 %v799
    %v823 = vpop.xlane.xlu0 %822
    %824 = vadd.xlane.f32.xlu0 %v800
    %v825 = vpop.xlane.xlu0 %824
    %826 = vadd.xlane.f32.xlu0 %v801
    %v827 = vpop.xlane.xlu0 %826
    %828 = vadd.xlane.f32.xlu0 %v802
    %v829 = vpop.xlane.xlu0 %828
    %830 = vadd.xlane.f32.xlu0 %v803
    %v831 = vpop.xlane.xlu0 %830
    %832 = vadd.xlane.f32.xlu0 %v804
    %v833 = vpop.xlane.xlu0 %832
    %834 = vadd.xlane.f32.xlu0 %v805
    %v835 = vpop.xlane.xlu0 %834
    %836 = vadd.xlane.f32.xlu0 %v806
    %v837 = vpop.xlane.xlu0 %836
    %838 = vadd.xlane.f32.xlu0 %v807
    %v839 = vpop.xlane.xlu0 %838
    %v840 = vmax.f32 %v809, 1e-12
    %v841 = vmax.f32 %v811, 1e-12
    %v842 = vmax.f32 %v813, 1e-12
    %v843 = vmax.f32 %v815, 1e-12
    %v844 = vmax.f32 %v817, 1e-12
    %v845 = vmax.f32 %v819, 1e-12
    %v846 = vmax.f32 %v821, 1e-12
    %v847 = vmax.f32 %v823, 1e-12
    %v848 = vmax.f32 %v825, 1e-12
    %v849 = vmax.f32 %v827, 1e-12
    %v850 = vmax.f32 %v829, 1e-12
    %v851 = vmax.f32 %v831, 1e-12
    %v852 = vmax.f32 %v833, 1e-12
    %v853 = vmax.f32 %v835, 1e-12
    %v854 = vmax.f32 %v837, 1e-12
    %v855 = vmax.f32 %v839, 1e-12
    %v856 = vrcp.pop %v840
    %v857 = vrcp.pop %v841
    %v858 = vrcp.pop %v842
    %v859 = vrcp.pop %v843
    %v860 = vrcp.pop %v844
    %v861 = vrcp.pop %v845
    %v862 = vrcp.pop %v846
    %v863 = vrcp.pop %v847
    %v864 = vrcp.pop %v848
    %v865 = vrcp.pop %v849
    %v866 = vrcp.pop %v850
    %v867 = vrcp.pop %v851
    %v868 = vrcp.pop %v852
    %v869 = vrcp.pop %v853
    %v870 = vrcp.pop %v854
    %v871 = vrcp.pop %v855
    %v872 = vmul.f32 %v840, %v856
    %v873 = vmul.f32 %v841, %v857
    %v874 = vmul.f32 %v842, %v858
    %v875 = vmul.f32 %v843, %v859
    %v876 = vmul.f32 %v844, %v860
    %v877 = vmul.f32 %v845, %v861
    %v878 = vmul.f32 %v846, %v862
    %v879 = vmul.f32 %v847, %v863
    %v880 = vmul.f32 %v848, %v864
    %v881 = vmul.f32 %v849, %v865
    %v882 = vmul.f32 %v850, %v866
    %v883 = vmul.f32 %v851, %v867
    %v884 = vmul.f32 %v852, %v868
    %v885 = vmul.f32 %v853, %v869
    %v886 = vmul.f32 %v854, %v870
    %v887 = vmul.f32 %v855, %v871
    %v888 = vsub.f32 2.0, %v872
    %v889 = vsub.f32 2.0, %v873
    %v890 = vsub.f32 2.0, %v874
    %v891 = vsub.f32 2.0, %v875
    %v892 = vsub.f32 2.0, %v876
    %v893 = vsub.f32 2.0, %v877
    %v894 = vsub.f32 2.0, %v878
    %v895 = vsub.f32 2.0, %v879
    %v896 = vsub.f32 2.0, %v880
    %v897 = vsub.f32 2.0, %v881
    %v898 = vsub.f32 2.0, %v882
    %v899 = vsub.f32 2.0, %v883
    %v900 = vsub.f32 2.0, %v884
    %v901 = vsub.f32 2.0, %v885
    %v902 = vsub.f32 2.0, %v886
    %v903 = vsub.f32 2.0, %v887
    %v904 = vmul.f32 %v856, %v888
    %v905 = vmul.f32 %v857, %v889
    %v906 = vmul.f32 %v858, %v890
    %v907 = vmul.f32 %v859, %v891
    %v908 = vmul.f32 %v860, %v892
    %v909 = vmul.f32 %v861, %v893
    %v910 = vmul.f32 %v862, %v894
    %v911 = vmul.f32 %v863, %v895
    %v912 = vmul.f32 %v864, %v896
    %v913 = vmul.f32 %v865, %v897
    %v914 = vmul.f32 %v866, %v898
    %v915 = vmul.f32 %v867, %v899
    %v916 = vmul.f32 %v868, %v900
    %v917 = vmul.f32 %v869, %v901
    %v918 = vmul.f32 %v870, %v902
    %v919 = vmul.f32 %v871, %v903
    %v920 = vpack.c.bf16 %v777, %v776
    %v921 = vpack.c.bf16 %v779, %v778
    %v922 = vpack.c.bf16 %v781, %v780
    %v923 = vpack.c.bf16 %v783, %v782
    %v924 = vpack.c.bf16 %v785, %v784
    %v925 = vpack.c.bf16 %v787, %v786
    %v926 = vpack.c.bf16 %v789, %v788
    %v927 = vpack.c.bf16 %v791, %v790
    %v928 = vld [vmem:[%s6] sm:$0xff]
    %v929 = vld [vmem:[%s6 + $0x8] sm:$0xff]
    %v930 = vld [vmem:[%s6 + $0x10] sm:$0xff]
    %v931 = vld [vmem:[%s6 + $0x18] sm:$0xff]
    %v932 = vld [vmem:[%s7] sm:$0x1]
    %v933 = vpack.c.bf16 %v745, %v744
    %v934 = vpack.c.bf16 %v747, %v746
    %v935 = vpack.c.bf16 %v749, %v748
    %v936 = vpack.c.bf16 %v751, %v750
    %v937 = vpack.c.bf16 %v753, %v752
    %v938 = vpack.c.bf16 %v755, %v754
    %v939 = vpack.c.bf16 %v757, %v756
    %v940 = vpack.c.bf16 %v759, %v758
    %v941 = vpack.c.bf16 %v929, %v928
    %v942 = vpack.c.bf16 %v931, %v930
    %v944 = vsel %vm278, %v933, 0
    %v947 = vsel %vm278, %v934, 0
    %v950 = vsel %vm278, %v935, 0
    %v953 = vsel %vm278, %v936, 0
    %v956 = vsel %vm278, %v937, 0
    %v959 = vsel %vm278, %v938, 0
    %v962 = vsel %vm278, %v939, 0
    %v965 = vsel %vm278, %v940, 0
    %967 = vmatprep.subr.bf16.mxu0 0
    %968 = vmatpush1.bf16.msra.mxu0 %v941
    %969 = vmatprep.subr.bf16.mxu0 0
    %970 = vmatpush1.bf16.msra.mxu0 %v942
    %971 = vmatprep.subr.bf16.mxu0 0
    %972 = vmatpush1.bf16.msra.mxu0 0
    %973 = vmatprep.subr.bf16.mxu0 0
    %974 = vmatpush1.bf16.msra.mxu0 0
    %975 = vmatprep.subr.bf16.mxu0 0
    %976 = vmatpush1.bf16.msra.mxu0 0
    %977 = vmatprep.subr.bf16.mxu0 0
    %978 = vmatpush1.bf16.msra.mxu0 0
    %979 = vmatprep.subr.bf16.mxu0 0
    %980 = vmatpush1.bf16.msra.mxu0 0
    %981 = vmatprep.subr.bf16.mxu0 0
    %982 = vmatpush1.bf16.msra.mxu0 0
    %983 = vmatprep.subr.bf16.mxu0 0
    %984 = vmatpush1.bf16.msra.mxu0 0
    %985 = vmatprep.subr.bf16.mxu0 0
    %986 = vmatpush1.bf16.msra.mxu0 0
    %987 = vmatprep.subr.bf16.mxu0 0
    %988 = vmatpush1.bf16.msra.mxu0 0
    %989 = vmatprep.subr.bf16.mxu0 0
    %990 = vmatpush1.bf16.msra.mxu0 0
    %991 = vmatprep.subr.bf16.mxu0 0
    %992 = vmatpush1.bf16.msra.mxu0 0
    %993 = vmatprep.subr.bf16.mxu0 0
    %994 = vmatpush1.bf16.msra.mxu0 0
    %995 = vmatprep.subr.bf16.mxu0 0
    %996 = vmatpush1.bf16.msra.mxu0 0
    %997 = vmatprep.subr.bf16.mxu0 0
    %998 = vmatpush1.bf16.msra.mxu0 0
    %999 = vmatprep.mubr.bf16.mxu0 0
    %1000 = vmatmul.mubr.bf16.gmra.mrb[0].mxu0 %v944
    %v1001 = vpop.f32.mrb[0].mxu0
    %v1002 = vadd.f32 0.0, %v1001
    %v1003 = vpop.f32.mrb[0].mxu0
    %v1004 = vpop.f32.mrb[0].mxu0
    %v1005 = vadd.f32 0.0, %v1004
    %v1006 = vpop.f32.mrb[0].mxu0
    %1007 = vmatprep.mubr.bf16.mxu0 0
    %1008 = vmatmul.mubr.bf16.gmra.mrb[0].mxu0 %v947
    %v1009 = vpop.f32.mrb[0].mxu0
    %v1010 = vadd.f32 0.0, %v1009
    %v1011 = vpop.f32.mrb[0].mxu0
    %v1012 = vpop.f32.mrb[0].mxu0
    %v1013 = vadd.f32 0.0, %v1012
    %v1014 = vpop.f32.mrb[0].mxu0
    %1015 = vmatprep.mubr.bf16.mxu0 0
    %1016 = vmatmul.mubr.bf16.gmra.mrb[0].mxu0 %v950
    %v1017 = vpop.f32.mrb[0].mxu0
    %v1018 = vadd.f32 0.0, %v1017
    %v1019 = vpop.f32.mrb[0].mxu0
    %v1020 = vpop.f32.mrb[0].mxu0
    %v1021 = vadd.f32 0.0, %v1020
    %v1022 = vpop.f32.mrb[0].mxu0
    %1023 = vmatprep.mubr.bf16.mxu0 0
    %1024 = vmatmul.mubr.bf16.gmra.mrb[0].mxu0 %v953
    %v1025 = vpop.f32.mrb[0].mxu0
    %v1026 = vadd.f32 0.0, %v1025
    %v1027 = vpop.f32.mrb[0].mxu0
    %v1028 = vpop.f32.mrb[0].mxu0
    %v1029 = vadd.f32 0.0, %v1028
    %v1030 = vpop.f32.mrb[0].mxu0
    %1031 = vmatprep.mubr.bf16.mxu0 0
    %1032 = vmatmul.mubr.bf16.gmra.mrb[0].mxu0 %v956
    %v1033 = vpop.f32.mrb[0].mxu0
    %v1034 = vadd.f32 0.0, %v1033
    %v1035 = vpop.f32.mrb[0].mxu0
    %v1036 = vpop.f32.mrb[0].mxu0
    %v1037 = vadd.f32 0.0, %v1036
    %v1038 = vpop.f32.mrb[0].mxu0
    %1039 = vmatprep.mubr.bf16.mxu0 0
    %1040 = vmatmul.mubr.bf16.gmra.mrb[0].mxu0 %v959
    %v1041 = vpop.f32.mrb[0].mxu0
    %v1042 = vadd.f32 0.0, %v1041
    %v1043 = vpop.f32.mrb[0].mxu0
    %v1044 = vpop.f32.mrb[0].mxu0
    %v1045 = vadd.f32 0.0, %v1044
    %v1046 = vpop.f32.mrb[0].mxu0
    %1047 = vmatprep.mubr.bf16.mxu0 0
    %1048 = vmatmul.mubr.bf16.gmra.mrb[0].mxu0 %v962
    %v1049 = vpop.f32.mrb[0].mxu0
    %v1050 = vadd.f32 0.0, %v1049
    %v1051 = vpop.f32.mrb[0].mxu0
    %v1052 = vpop.f32.mrb[0].mxu0
    %v1053 = vadd.f32 0.0, %v1052
    %v1054 = vpop.f32.mrb[0].mxu0
    %1055 = vmatprep.mubr.bf16.mxu0 0
    %1056 = vmatmul.mubr.bf16.gmra.mrb[0].mxu0 %v965
    %v1057 = vpop.f32.mrb[0].mxu0
    %v1058 = vadd.f32 0.0, %v1057
    %v1059 = vpop.f32.mrb[0].mxu0
    %v1060 = vpop.f32.mrb[0].mxu0
    %v1061 = vadd.f32 0.0, %v1060
    %v1062 = vpop.f32.mrb[0].mxu0
    %1063 = vdwg.mxu0
    %v1064 = vpack.c.bf16 %v707, %v706
    %v1065 = vpack.c.bf16 %v709, %v708
    %v1066 = vpack.c.bf16 %v711, %v710
    %v1067 = vpack.c.bf16 %v713, %v712
    %v1068 = vpack.c.bf16 %v715, %v714
    %v1069 = vpack.c.bf16 %v717, %v716
    %v1070 = vpack.c.bf16 %v719, %v718
    %v1071 = vpack.c.bf16 %v721, %v720
    %1080 = vrot.lane.b32.xlu0 %v1064, 96
    %v1081 = vpop.permute.xlu0 %1080
    %1082 = vrot.lane.b32.xlu0 %v1065, 96
    %v1083 = vpop.permute.xlu0 %1082
    %1084 = vrot.lane.b32.xlu0 %v1066, 96
    %v1085 = vpop.permute.xlu0 %1084
    %1086 = vrot.lane.b32.xlu0 %v1067, 96
    %v1087 = vpop.permute.xlu0 %1086
    %1088 = vrot.lane.b32.xlu0 %v1068, 96
    %v1089 = vpop.permute.xlu0 %1088
    %1090 = vrot.lane.b32.xlu0 %v1069, 96
    %v1091 = vpop.permute.xlu0 %1090
    %1092 = vrot.lane.b32.xlu0 %v1070, 96
    %v1093 = vpop.permute.xlu0 %1092
    %1094 = vrot.lane.b32.xlu0 %v1071, 96
    %v1095 = vpop.permute.xlu0 %1094
    %1104 = vmatprep.subr.bf16.mxu0 0
    %1105 = vmatpush1.bf16.msra.mxu0 %v1081
    %1106 = vmatprep.subr.bf16.mxu0 0
    %1107 = vmatpush1.bf16.msra.mxu0 %v1083
    %1108 = vmatprep.subr.bf16.mxu0 0
    %1109 = vmatpush1.bf16.msra.mxu0 %v1085
    %1110 = vmatprep.subr.bf16.mxu0 0
    %1111 = vmatpush1.bf16.msra.mxu0 %v1087
    %1112 = vmatprep.subr.bf16.mxu0 0
    %1113 = vmatpush1.bf16.msra.mxu0 %v1089
    %1114 = vmatprep.subr.bf16.mxu0 0
    %1115 = vmatpush1.bf16.msra.mxu0 %v1091
    %1116 = vmatprep.subr.bf16.mxu0 0
    %1117 = vmatpush1.bf16.msra.mxu0 %v1093
    %1118 = vmatprep.subr.bf16.mxu0 0
    %1119 = vmatpush1.bf16.msra.mxu0 %v1095
    %1120 = vmatprep.subr.bf16.mxu0 0
    %1121 = vmatpush1.bf16.msra.mxu0 0
    %1122 = vmatprep.subr.bf16.mxu0 0
    %1123 = vmatpush1.bf16.msra.mxu0 0
    %1124 = vmatprep.subr.bf16.mxu0 0
    %1125 = vmatpush1.bf16.msra.mxu0 0
    %1126 = vmatprep.subr.bf16.mxu0 0
    %1127 = vmatpush1.bf16.msra.mxu0 0
    %1128 = vmatprep.subr.bf16.mxu0 0
    %1129 = vmatpush1.bf16.msra.mxu0 0
    %1130 = vmatprep.subr.bf16.mxu0 0
    %1131 = vmatpush1.bf16.msra.mxu0 0
    %1132 = vmatprep.subr.bf16.mxu0 0
    %1133 = vmatpush1.bf16.msra.mxu0 0
    %1134 = vmatprep.subr.bf16.mxu0 0
    %1135 = vmatpush1.bf16.msra.mxu0 0
    %1136 = vmatprep.mubr.bf16.mxu0 0
    %1137 = vmatmul.mubr.bf16.gmra.mrb[0].mxu0 %v920
    %v1138 = vpop.f32.mrb[0].mxu0
    %v1139 = vadd.f32 0.0, %v1138
    %v1140 = vpop.f32.mrb[0].mxu0
    %v1141 = vpop.f32.mrb[0].mxu0
    %v1142 = vadd.f32 0.0, %v1141
    %v1143 = vpop.f32.mrb[0].mxu0
    %1144 = vmatprep.mubr.bf16.mxu0 0
    %1145 = vmatmul.mubr.bf16.gmra.mrb[0].mxu0 %v921
    %v1146 = vpop.f32.mrb[0].mxu0
    %v1147 = vadd.f32 0.0, %v1146
    %v1148 = vpop.f32.mrb[0].mxu0
    %v1149 = vpop.f32.mrb[0].mxu0
    %v1150 = vadd.f32 0.0, %v1149
    %v1151 = vpop.f32.mrb[0].mxu0
    %1152 = vmatprep.mubr.bf16.mxu0 0
    %1153 = vmatmul.mubr.bf16.gmra.mrb[0].mxu0 %v922
    %v1154 = vpop.f32.mrb[0].mxu0
    %v1155 = vadd.f32 0.0, %v1154
    %v1156 = vpop.f32.mrb[0].mxu0
    %v1157 = vpop.f32.mrb[0].mxu0
    %v1158 = vadd.f32 0.0, %v1157
    %v1159 = vpop.f32.mrb[0].mxu0
    %1160 = vmatprep.mubr.bf16.mxu0 0
    %1161 = vmatmul.mubr.bf16.gmra.mrb[0].mxu0 %v923
    %v1162 = vpop.f32.mrb[0].mxu0
    %v1163 = vadd.f32 0.0, %v1162
    %v1164 = vpop.f32.mrb[0].mxu0
    %v1165 = vpop.f32.mrb[0].mxu0
    %v1166 = vadd.f32 0.0, %v1165
    %v1167 = vpop.f32.mrb[0].mxu0
    %1168 = vmatprep.mubr.bf16.mxu0 0
    %1169 = vmatmul.mubr.bf16.gmra.mrb[0].mxu0 %v924
    %v1170 = vpop.f32.mrb[0].mxu0
    %v1171 = vadd.f32 0.0, %v1170
    %v1172 = vpop.f32.mrb[0].mxu0
    %v1173 = vpop.f32.mrb[0].mxu0
    %v1174 = vadd.f32 0.0, %v1173
    %v1175 = vpop.f32.mrb[0].mxu0
    %1176 = vmatprep.mubr.bf16.mxu0 0
    %1177 = vmatmul.mubr.bf16.gmra.mrb[0].mxu0 %v925
    %v1178 = vpop.f32.mrb[0].mxu0
    %v1179 = vadd.f32 0.0, %v1178
    %v1180 = vpop.f32.mrb[0].mxu0
    %v1181 = vpop.f32.mrb[0].mxu0
    %v1182 = vadd.f32 0.0, %v1181
    %v1183 = vpop.f32.mrb[0].mxu0
    %1184 = vmatprep.mubr.bf16.mxu0 0
    %1185 = vmatmul.mubr.bf16.gmra.mrb[0].mxu0 %v926
    %v1186 = vpop.f32.mrb[0].mxu0
    %v1187 = vadd.f32 0.0, %v1186
    %v1188 = vpop.f32.mrb[0].mxu0
    %v1189 = vpop.f32.mrb[0].mxu0
    %v1190 = vadd.f32 0.0, %v1189
    %v1191 = vpop.f32.mrb[0].mxu0
    %1192 = vmatprep.mubr.bf16.mxu0 0
    %1193 = vmatmul.mubr.bf16.gmra.mrb[0].mxu0 %v927
    %v1194 = vpop.f32.mrb[0].mxu0
    %v1195 = vadd.f32 0.0, %v1194
    %v1196 = vpop.f32.mrb[0].mxu0
    %v1197 = vpop.f32.mrb[0].mxu0
    %v1198 = vadd.f32 0.0, %v1197
    %v1199 = vpop.f32.mrb[0].mxu0
    %1200 = vdwg.mxu0
    %v1201 = vmul.f32 %v904, %v1139
    %v1202 = vmul.f32 %v905, %v1142
    %v1203 = vmul.f32 %v906, %v1147
    %v1204 = vmul.f32 %v907, %v1150
    %v1205 = vmul.f32 %v908, %v1155
    %v1206 = vmul.f32 %v909, %v1158
    %v1207 = vmul.f32 %v910, %v1163
    %v1208 = vmul.f32 %v911, %v1166
    %v1209 = vmul.f32 %v912, %v1171
    %v1210 = vmul.f32 %v913, %v1174
    %v1211 = vmul.f32 %v914, %v1179
    %v1212 = vmul.f32 %v915, %v1182
    %v1213 = vmul.f32 %v916, %v1187
    %v1214 = vmul.f32 %v917, %v1190
    %v1215 = vmul.f32 %v918, %v1195
    %v1216 = vmul.f32 %v919, %v1198
    %1233 = vrot.lane.b32.xlu0 %v1201, 8
    %v1234 = vpop.permute.xlu0 %1233
    %1235 = vrot.lane.b32.xlu0 %v1202, 8
    %v1236 = vpop.permute.xlu0 %1235
    %1237 = vrot.lane.b32.xlu0 %v1203, 8
    %v1238 = vpop.permute.xlu0 %1237
    %1239 = vrot.lane.b32.xlu0 %v1204, 8
    %v1240 = vpop.permute.xlu0 %1239
    %1241 = vrot.lane.b32.xlu0 %v1205, 8
    %v1242 = vpop.permute.xlu0 %1241
    %1243 = vrot.lane.b32.xlu0 %v1206, 8
    %v1244 = vpop.permute.xlu0 %1243
    %1245 = vrot.lane.b32.xlu0 %v1207, 8
    %v1246 = vpop.permute.xlu0 %1245
    %1247 = vrot.lane.b32.xlu0 %v1208, 8
    %v1248 = vpop.permute.xlu0 %1247
    %1249 = vrot.lane.b32.xlu0 %v1209, 8
    %v1250 = vpop.permute.xlu0 %1249
    %1251 = vrot.lane.b32.xlu0 %v1210, 8
    %v1252 = vpop.permute.xlu0 %1251
    %1253 = vrot.lane.b32.xlu0 %v1211, 8
    %v1254 = vpop.permute.xlu0 %1253
    %1255 = vrot.lane.b32.xlu0 %v1212, 8
    %v1256 = vpop.permute.xlu0 %1255
    %1257 = vrot.lane.b32.xlu0 %v1213, 8
    %v1258 = vpop.permute.xlu0 %1257
    %1259 = vrot.lane.b32.xlu0 %v1214, 8
    %v1260 = vpop.permute.xlu0 %1259
    %1261 = vrot.lane.b32.xlu0 %v1215, 8
    %v1262 = vpop.permute.xlu0 %1261
    %1263 = vrot.lane.b32.xlu0 %v1216, 8
    %v1264 = vpop.permute.xlu0 %1263
    %vm1281 = vcmask 64512
    %v1282 = vsel %vm1281, %v1002, %v1234
    %v1283 = vsel %vm1281, %v1005, %v1236
    %v1284 = vsel %vm1281, %v1010, %v1238
    %v1285 = vsel %vm1281, %v1013, %v1240
    %v1286 = vsel %vm1281, %v1018, %v1242
    %v1287 = vsel %vm1281, %v1021, %v1244
    %v1288 = vsel %vm1281, %v1026, %v1246
    %v1289 = vsel %vm1281, %v1029, %v1248
    %v1290 = vsel %vm1281, %v1034, %v1250
    %v1291 = vsel %vm1281, %v1037, %v1252
    %v1292 = vsel %vm1281, %v1042, %v1254
    %v1293 = vsel %vm1281, %v1045, %v1256
    %v1294 = vsel %vm1281, %v1050, %v1258
    %v1295 = vsel %vm1281, %v1053, %v1260
    %v1296 = vsel %vm1281, %v1058, %v1262
    %v1297 = vsel %vm1281, %v1061, %v1264
    %v1298 = vpack.c.bf16 %v1283, %v1282
    %v1299 = vpack.c.bf16 %v1285, %v1284
    %v1300 = vpack.c.bf16 %v1287, %v1286
    %v1301 = vpack.c.bf16 %v1289, %v1288
    %v1302 = vpack.c.bf16 %v1291, %v1290
    %v1303 = vpack.c.bf16 %v1293, %v1292
    %v1304 = vpack.c.bf16 %v1295, %v1294
    %v1305 = vpack.c.bf16 %v1297, %v1296
    %1306 = vmatprep.subr.bf16.mxu0 0
    %1307 = vmatpush1.bf16.msra.mxu0 %v1298
    %1308 = vmatprep.subr.bf16.mxu0 0
    %1309 = vmatpush1.bf16.msra.mxu0 %v1299
    %1310 = vmatprep.subr.bf16.mxu0 0
    %1311 = vmatpush1.bf16.msra.mxu0 %v1300
    %1312 = vmatprep.subr.bf16.mxu0 0
    %1313 = vmatpush1.bf16.msra.mxu0 %v1301
    %1314 = vmatprep.subr.bf16.mxu0 0
    %1315 = vmatpush1.bf16.msra.mxu0 %v1302
    %1316 = vmatprep.subr.bf16.mxu0 0
    %1317 = vmatpush1.bf16.msra.mxu0 %v1303
    %1318 = vmatprep.subr.bf16.mxu0 0
    %1319 = vmatpush1.bf16.msra.mxu0 %v1304
    %1320 = vmatprep.subr.bf16.mxu0 0
    %1321 = vmatpush1.bf16.msra.mxu0 %v1305
    %1322 = vmatprep.subr.bf16.mxu0 0
    %1323 = vmatpush1.bf16.msra.mxu0 0
    %1324 = vmatprep.subr.bf16.mxu0 0
    %1325 = vmatpush1.bf16.msra.mxu0 0
    %1326 = vmatprep.subr.bf16.mxu0 0
    %1327 = vmatpush1.bf16.msra.mxu0 0
    %1328 = vmatprep.subr.bf16.mxu0 0
    %1329 = vmatpush1.bf16.msra.mxu0 0
    %1330 = vmatprep.subr.bf16.mxu0 0
    %1331 = vmatpush1.bf16.msra.mxu0 0
    %1332 = vmatprep.subr.bf16.mxu0 0
    %1333 = vmatpush1.bf16.msra.mxu0 0
    %1334 = vmatprep.subr.bf16.mxu0 0
    %1335 = vmatpush1.bf16.msra.mxu0 0
    %1336 = vmatprep.subr.bf16.mxu0 0
    %1337 = vmatpush1.bf16.msra.mxu0 0
    %1338 = vmatprep.mubr.bf16.mxu0 0
    %1339 = vmatmul.mubr.bf16.gmra.mrb[0].mxu0 %v920
    %v1340 = vpop.f32.mrb[0].mxu0
    %v1341 = vadd.f32 0.0, %v1340
    %v1342 = vpop.f32.mrb[0].mxu0
    %v1343 = vpop.f32.mrb[0].mxu0
    %v1344 = vadd.f32 0.0, %v1343
    %v1345 = vpop.f32.mrb[0].mxu0
    %1346 = vmatprep.mubr.bf16.mxu0 0
    %1347 = vmatmul.mubr.bf16.gmra.mrb[0].mxu0 %v921
    %v1348 = vpop.f32.mrb[0].mxu0
    %v1349 = vadd.f32 0.0, %v1348
    %v1350 = vpop.f32.mrb[0].mxu0
    %v1351 = vpop.f32.mrb[0].mxu0
    %v1352 = vadd.f32 0.0, %v1351
    %v1353 = vpop.f32.mrb[0].mxu0
    %1354 = vmatprep.mubr.bf16.mxu0 0
    %1355 = vmatmul.mubr.bf16.gmra.mrb[0].mxu0 %v922
    %v1356 = vpop.f32.mrb[0].mxu0
    %v1357 = vadd.f32 0.0, %v1356
    %v1358 = vpop.f32.mrb[0].mxu0
    %v1359 = vpop.f32.mrb[0].mxu0
    %v1360 = vadd.f32 0.0, %v1359
    %v1361 = vpop.f32.mrb[0].mxu0
    %1362 = vmatprep.mubr.bf16.mxu0 0
    %1363 = vmatmul.mubr.bf16.gmra.mrb[0].mxu0 %v923
    %v1364 = vpop.f32.mrb[0].mxu0
    %v1365 = vadd.f32 0.0, %v1364
    %v1366 = vpop.f32.mrb[0].mxu0
    %v1367 = vpop.f32.mrb[0].mxu0
    %v1368 = vadd.f32 0.0, %v1367
    %v1369 = vpop.f32.mrb[0].mxu0
    %1370 = vmatprep.mubr.bf16.mxu0 0
    %1371 = vmatmul.mubr.bf16.gmra.mrb[0].mxu0 %v924
    %v1372 = vpop.f32.mrb[0].mxu0
    %v1373 = vadd.f32 0.0, %v1372
    %v1374 = vpop.f32.mrb[0].mxu0
    %v1375 = vpop.f32.mrb[0].mxu0
    %v1376 = vadd.f32 0.0, %v1375
    %v1377 = vpop.f32.mrb[0].mxu0
    %1378 = vmatprep.mubr.bf16.mxu0 0
    %1379 = vmatmul.mubr.bf16.gmra.mrb[0].mxu0 %v925
    %v1380 = vpop.f32.mrb[0].mxu0
    %v1381 = vadd.f32 0.0, %v1380
    %v1382 = vpop.f32.mrb[0].mxu0
    %v1383 = vpop.f32.mrb[0].mxu0
    %v1384 = vadd.f32 0.0, %v1383
    %v1385 = vpop.f32.mrb[0].mxu0
    %1386 = vmatprep.mubr.bf16.mxu0 0
    %1387 = vmatmul.mubr.bf16.gmra.mrb[0].mxu0 %v926
    %v1388 = vpop.f32.mrb[0].mxu0
    %v1389 = vadd.f32 0.0, %v1388
    %v1390 = vpop.f32.mrb[0].mxu0
    %v1391 = vpop.f32.mrb[0].mxu0
    %v1392 = vadd.f32 0.0, %v1391
    %v1393 = vpop.f32.mrb[0].mxu0
    %1394 = vmatprep.mubr.bf16.mxu0 0
    %1395 = vmatmul.mubr.bf16.gmra.mrb[0].mxu0 %v927
    %v1396 = vpop.f32.mrb[0].mxu0
    %v1397 = vadd.f32 0.0, %v1396
    %v1398 = vpop.f32.mrb[0].mxu0
    %v1399 = vpop.f32.mrb[0].mxu0
    %v1400 = vadd.f32 0.0, %v1399
    %v1401 = vpop.f32.mrb[0].mxu0
    %1402 = vdwg.mxu0
    %v1403 = vmul.f32 %v904, %v1341
    %v1404 = vmul.f32 %v905, %v1344
    %v1405 = vmul.f32 %v906, %v1349
    %v1406 = vmul.f32 %v907, %v1352
    %v1407 = vmul.f32 %v908, %v1357
    %v1408 = vmul.f32 %v909, %v1360
    %v1409 = vmul.f32 %v910, %v1365
    %v1410 = vmul.f32 %v911, %v1368
    %v1411 = vmul.f32 %v912, %v1373
    %v1412 = vmul.f32 %v913, %v1376
    %v1413 = vmul.f32 %v914, %v1381
    %v1414 = vmul.f32 %v915, %v1384
    %v1415 = vmul.f32 %v916, %v1389
    %v1416 = vmul.f32 %v917, %v1392
    %v1417 = vmul.f32 %v918, %v1397
    %v1418 = vmul.f32 %v919, %v1400
    %v1420 = vlaneseq
    %v1421 = vshrl.u32 %v1420, 7
    %v1422 = vsub.s32 0, %v1421
    %v1423 = vrot.slane %v932, %v1422
    %v1425 = vadd.f32 %v1403, %v1423
    %v1426 = vadd.f32 %v1404, %v1423
    %v1427 = vadd.f32 %v1405, %v1423
    %v1428 = vadd.f32 %v1406, %v1423
    %v1429 = vadd.f32 %v1407, %v1423
    %v1430 = vadd.f32 %v1408, %v1423
    %v1431 = vadd.f32 %v1409, %v1423
    %v1432 = vadd.f32 %v1410, %v1423
    %v1433 = vadd.f32 %v1411, %v1423
    %v1434 = vadd.f32 %v1412, %v1423
    %v1435 = vadd.f32 %v1413, %v1423
    %v1436 = vadd.f32 %v1414, %v1423
    %v1437 = vadd.f32 %v1415, %v1423
    %v1438 = vadd.f32 %v1416, %v1423
    %v1439 = vadd.f32 %v1417, %v1423
    %v1440 = vadd.f32 %v1418, %v1423
    %v1441 = vsel %vm1281, %v1425, -inf
    %1442 = vmax.xlane.f32.xlu0 %v1441
    %v1443 = vpop.xlane.xlu0 %1442
    %v1444 = vsel %vm1281, %v1426, -inf
    %1445 = vmax.xlane.f32.xlu0 %v1444
    %v1446 = vpop.xlane.xlu0 %1445
    %v1447 = vsel %vm1281, %v1427, -inf
    %1448 = vmax.xlane.f32.xlu0 %v1447
    %v1449 = vpop.xlane.xlu0 %1448
    %v1450 = vsel %vm1281, %v1428, -inf
    %1451 = vmax.xlane.f32.xlu0 %v1450
    %v1452 = vpop.xlane.xlu0 %1451
    %v1453 = vsel %vm1281, %v1429, -inf
    %1454 = vmax.xlane.f32.xlu0 %v1453
    %v1455 = vpop.xlane.xlu0 %1454
    %v1456 = vsel %vm1281, %v1430, -inf
    %1457 = vmax.xlane.f32.xlu0 %v1456
    %v1458 = vpop.xlane.xlu0 %1457
    %v1459 = vsel %vm1281, %v1431, -inf
    %1460 = vmax.xlane.f32.xlu0 %v1459
    %v1461 = vpop.xlane.xlu0 %1460
    %v1462 = vsel %vm1281, %v1432, -inf
    %1463 = vmax.xlane.f32.xlu0 %v1462
    %v1464 = vpop.xlane.xlu0 %1463
    %v1465 = vsel %vm1281, %v1433, -inf
    %1466 = vmax.xlane.f32.xlu0 %v1465
    %v1467 = vpop.xlane.xlu0 %1466
    %v1468 = vsel %vm1281, %v1434, -inf
    %1469 = vmax.xlane.f32.xlu0 %v1468
    %v1470 = vpop.xlane.xlu0 %1469
    %v1471 = vsel %vm1281, %v1435, -inf
    %1472 = vmax.xlane.f32.xlu0 %v1471
    %v1473 = vpop.xlane.xlu0 %1472
    %v1474 = vsel %vm1281, %v1436, -inf
    %1475 = vmax.xlane.f32.xlu0 %v1474
    %v1476 = vpop.xlane.xlu0 %1475
    %v1477 = vsel %vm1281, %v1437, -inf
    %1478 = vmax.xlane.f32.xlu0 %v1477
    %v1479 = vpop.xlane.xlu0 %1478
    %v1480 = vsel %vm1281, %v1438, -inf
    %1481 = vmax.xlane.f32.xlu0 %v1480
    %v1482 = vpop.xlane.xlu0 %1481
    %v1483 = vsel %vm1281, %v1439, -inf
    %1484 = vmax.xlane.f32.xlu0 %v1483
    %v1485 = vpop.xlane.xlu0 %1484
    %v1486 = vsel %vm1281, %v1440, -inf
    %1487 = vmax.xlane.f32.xlu0 %v1486
    %v1488 = vpop.xlane.xlu0 %1487
    %v1489 = vsub.f32 %v1425, %v1443
    %v1490 = vsub.f32 %v1426, %v1446
    %v1491 = vsub.f32 %v1427, %v1449
    %v1492 = vsub.f32 %v1428, %v1452
    %v1493 = vsub.f32 %v1429, %v1455
    %v1494 = vsub.f32 %v1430, %v1458
    %v1495 = vsub.f32 %v1431, %v1461
    %v1496 = vsub.f32 %v1432, %v1464
    %v1497 = vsub.f32 %v1433, %v1467
    %v1498 = vsub.f32 %v1434, %v1470
    %v1499 = vsub.f32 %v1435, %v1473
    %v1500 = vsub.f32 %v1436, %v1476
    %v1501 = vsub.f32 %v1437, %v1479
    %v1502 = vsub.f32 %v1438, %v1482
    %v1503 = vsub.f32 %v1439, %v1485
    %v1504 = vsub.f32 %v1440, %v1488
    %v1505 = vmul.f32 %v1489, 1.442695
    %v1506 = vpow.pop %v1505
    %v1507 = vmul.f32 %v1490, 1.442695
    %v1508 = vpow.pop %v1507
    %v1509 = vmul.f32 %v1491, 1.442695
    %v1510 = vpow.pop %v1509
    %v1511 = vmul.f32 %v1492, 1.442695
    %v1512 = vpow.pop %v1511
    %v1513 = vmul.f32 %v1493, 1.442695
    %v1514 = vpow.pop %v1513
    %v1515 = vmul.f32 %v1494, 1.442695
    %v1516 = vpow.pop %v1515
    %v1517 = vmul.f32 %v1495, 1.442695
    %v1518 = vpow.pop %v1517
    %v1519 = vmul.f32 %v1496, 1.442695
    %v1520 = vpow.pop %v1519
    %v1521 = vmul.f32 %v1497, 1.442695
    %v1522 = vpow.pop %v1521
    %v1523 = vmul.f32 %v1498, 1.442695
    %v1524 = vpow.pop %v1523
    %v1525 = vmul.f32 %v1499, 1.442695
    %v1526 = vpow.pop %v1525
    %v1527 = vmul.f32 %v1500, 1.442695
    %v1528 = vpow.pop %v1527
    %v1529 = vmul.f32 %v1501, 1.442695
    %v1530 = vpow.pop %v1529
    %v1531 = vmul.f32 %v1502, 1.442695
    %v1532 = vpow.pop %v1531
    %v1533 = vmul.f32 %v1503, 1.442695
    %v1534 = vpow.pop %v1533
    %v1535 = vmul.f32 %v1504, 1.442695
    %v1536 = vpow.pop %v1535
    %v1537 = vsel %vm1281, %v1506, 0.0
    %1538 = vadd.xlane.f32.xlu0 %v1537
    %v1539 = vpop.xlane.xlu0 %1538
    %v1540 = vsel %vm1281, %v1508, 0.0
    %1541 = vadd.xlane.f32.xlu0 %v1540
    %v1542 = vpop.xlane.xlu0 %1541
    %v1543 = vsel %vm1281, %v1510, 0.0
    %1544 = vadd.xlane.f32.xlu0 %v1543
    %v1545 = vpop.xlane.xlu0 %1544
    %v1546 = vsel %vm1281, %v1512, 0.0
    %1547 = vadd.xlane.f32.xlu0 %v1546
    %v1548 = vpop.xlane.xlu0 %1547
    %v1549 = vsel %vm1281, %v1514, 0.0
    %1550 = vadd.xlane.f32.xlu0 %v1549
    %v1551 = vpop.xlane.xlu0 %1550
    %v1552 = vsel %vm1281, %v1516, 0.0
    %1553 = vadd.xlane.f32.xlu0 %v1552
    %v1554 = vpop.xlane.xlu0 %1553
    %v1555 = vsel %vm1281, %v1518, 0.0
    %1556 = vadd.xlane.f32.xlu0 %v1555
    %v1557 = vpop.xlane.xlu0 %1556
    %v1558 = vsel %vm1281, %v1520, 0.0
    %1559 = vadd.xlane.f32.xlu0 %v1558
    %v1560 = vpop.xlane.xlu0 %1559
    %v1561 = vsel %vm1281, %v1522, 0.0
    %1562 = vadd.xlane.f32.xlu0 %v1561
    %v1563 = vpop.xlane.xlu0 %1562
    %v1564 = vsel %vm1281, %v1524, 0.0
    %1565 = vadd.xlane.f32.xlu0 %v1564
    %v1566 = vpop.xlane.xlu0 %1565
    %v1567 = vsel %vm1281, %v1526, 0.0
    %1568 = vadd.xlane.f32.xlu0 %v1567
    %v1569 = vpop.xlane.xlu0 %1568
    %v1570 = vsel %vm1281, %v1528, 0.0
    %1571 = vadd.xlane.f32.xlu0 %v1570
    %v1572 = vpop.xlane.xlu0 %1571
    %v1573 = vsel %vm1281, %v1530, 0.0
    %1574 = vadd.xlane.f32.xlu0 %v1573
    %v1575 = vpop.xlane.xlu0 %1574
    %v1576 = vsel %vm1281, %v1532, 0.0
    %1577 = vadd.xlane.f32.xlu0 %v1576
    %v1578 = vpop.xlane.xlu0 %1577
    %v1579 = vsel %vm1281, %v1534, 0.0
    %1580 = vadd.xlane.f32.xlu0 %v1579
    %v1581 = vpop.xlane.xlu0 %1580
    %v1582 = vsel %vm1281, %v1536, 0.0
    %1583 = vadd.xlane.f32.xlu0 %v1582
    %v1584 = vpop.xlane.xlu0 %1583
    %v1585 = vlog2.pop %v1539
    %v1586 = vmul.f32 %v1585, 0.6931472
    %v1587 = vlog2.pop %v1542
    %v1588 = vmul.f32 %v1587, 0.6931472
    %v1589 = vlog2.pop %v1545
    %v1590 = vmul.f32 %v1589, 0.6931472
    %v1591 = vlog2.pop %v1548
    %v1592 = vmul.f32 %v1591, 0.6931472
    %v1593 = vlog2.pop %v1551
    %v1594 = vmul.f32 %v1593, 0.6931472
    %v1595 = vlog2.pop %v1554
    %v1596 = vmul.f32 %v1595, 0.6931472
    %v1597 = vlog2.pop %v1557
    %v1598 = vmul.f32 %v1597, 0.6931472
    %v1599 = vlog2.pop %v1560
    %v1600 = vmul.f32 %v1599, 0.6931472
    %v1601 = vlog2.pop %v1563
    %v1602 = vmul.f32 %v1601, 0.6931472
    %v1603 = vlog2.pop %v1566
    %v1604 = vmul.f32 %v1603, 0.6931472
    %v1605 = vlog2.pop %v1569
    %v1606 = vmul.f32 %v1605, 0.6931472
    %v1607 = vlog2.pop %v1572
    %v1608 = vmul.f32 %v1607, 0.6931472
    %v1609 = vlog2.pop %v1575
    %v1610 = vmul.f32 %v1609, 0.6931472
    %v1611 = vlog2.pop %v1578
    %v1612 = vmul.f32 %v1611, 0.6931472
    %v1613 = vlog2.pop %v1581
    %v1614 = vmul.f32 %v1613, 0.6931472
    %v1615 = vlog2.pop %v1584
    %v1616 = vmul.f32 %v1615, 0.6931472
    %v1617 = vsub.f32 %v1489, %v1586
    %v1618 = vsub.f32 %v1490, %v1588
    %v1619 = vsub.f32 %v1491, %v1590
    %v1620 = vsub.f32 %v1492, %v1592
    %v1621 = vsub.f32 %v1493, %v1594
    %v1622 = vsub.f32 %v1494, %v1596
    %v1623 = vsub.f32 %v1495, %v1598
    %v1624 = vsub.f32 %v1496, %v1600
    %v1625 = vsub.f32 %v1497, %v1602
    %v1626 = vsub.f32 %v1498, %v1604
    %v1627 = vsub.f32 %v1499, %v1606
    %v1628 = vsub.f32 %v1500, %v1608
    %v1629 = vsub.f32 %v1501, %v1610
    %v1630 = vsub.f32 %v1502, %v1612
    %v1631 = vsub.f32 %v1503, %v1614
    %v1632 = vsub.f32 %v1504, %v1616
    %vm1633 = vcmask 130112
    %v1634 = vsel %vm1633, %v1403, -inf
    %1635 = vmax.xlane.f32.xlu0 %v1634
    %v1636 = vpop.xlane.xlu0 %1635
    %v1637 = vsel %vm1633, %v1404, -inf
    %1638 = vmax.xlane.f32.xlu0 %v1637
    %v1639 = vpop.xlane.xlu0 %1638
    %v1640 = vsel %vm1633, %v1405, -inf
    %1641 = vmax.xlane.f32.xlu0 %v1640
    %v1642 = vpop.xlane.xlu0 %1641
    %v1643 = vsel %vm1633, %v1406, -inf
    %1644 = vmax.xlane.f32.xlu0 %v1643
    %v1645 = vpop.xlane.xlu0 %1644
    %v1646 = vsel %vm1633, %v1407, -inf
    %1647 = vmax.xlane.f32.xlu0 %v1646
    %v1648 = vpop.xlane.xlu0 %1647
    %v1649 = vsel %vm1633, %v1408, -inf
    %1650 = vmax.xlane.f32.xlu0 %v1649
    %v1651 = vpop.xlane.xlu0 %1650
    %v1652 = vsel %vm1633, %v1409, -inf
    %1653 = vmax.xlane.f32.xlu0 %v1652
    %v1654 = vpop.xlane.xlu0 %1653
    %v1655 = vsel %vm1633, %v1410, -inf
    %1656 = vmax.xlane.f32.xlu0 %v1655
    %v1657 = vpop.xlane.xlu0 %1656
    %v1658 = vsel %vm1633, %v1411, -inf
    %1659 = vmax.xlane.f32.xlu0 %v1658
    %v1660 = vpop.xlane.xlu0 %1659
    %v1661 = vsel %vm1633, %v1412, -inf
    %1662 = vmax.xlane.f32.xlu0 %v1661
    %v1663 = vpop.xlane.xlu0 %1662
    %v1664 = vsel %vm1633, %v1413, -inf
    %1665 = vmax.xlane.f32.xlu0 %v1664
    %v1666 = vpop.xlane.xlu0 %1665
    %v1667 = vsel %vm1633, %v1414, -inf
    %1668 = vmax.xlane.f32.xlu0 %v1667
    %v1669 = vpop.xlane.xlu0 %1668
    %v1670 = vsel %vm1633, %v1415, -inf
    %1671 = vmax.xlane.f32.xlu0 %v1670
    %v1672 = vpop.xlane.xlu0 %1671
    %v1673 = vsel %vm1633, %v1416, -inf
    %1674 = vmax.xlane.f32.xlu0 %v1673
    %v1675 = vpop.xlane.xlu0 %1674
    %v1676 = vsel %vm1633, %v1417, -inf
    %1677 = vmax.xlane.f32.xlu0 %v1676
    %v1678 = vpop.xlane.xlu0 %1677
    %v1679 = vsel %vm1633, %v1418, -inf
    %1680 = vmax.xlane.f32.xlu0 %v1679
    %v1681 = vpop.xlane.xlu0 %1680
    %v1682 = vsub.f32 %v1403, %v1636
    %v1683 = vsub.f32 %v1404, %v1639
    %v1684 = vsub.f32 %v1405, %v1642
    %v1685 = vsub.f32 %v1406, %v1645
    %v1686 = vsub.f32 %v1407, %v1648
    %v1687 = vsub.f32 %v1408, %v1651
    %v1688 = vsub.f32 %v1409, %v1654
    %v1689 = vsub.f32 %v1410, %v1657
    %v1690 = vsub.f32 %v1411, %v1660
    %v1691 = vsub.f32 %v1412, %v1663
    %v1692 = vsub.f32 %v1413, %v1666
    %v1693 = vsub.f32 %v1414, %v1669
    %v1694 = vsub.f32 %v1415, %v1672
    %v1695 = vsub.f32 %v1416, %v1675
    %v1696 = vsub.f32 %v1417, %v1678
    %v1697 = vsub.f32 %v1418, %v1681
    %v1698 = vmul.f32 %v1682, 1.442695
    %v1699 = vpow.pop %v1698
    %v1700 = vmul.f32 %v1683, 1.442695
    %v1701 = vpow.pop %v1700
    %v1702 = vmul.f32 %v1684, 1.442695
    %v1703 = vpow.pop %v1702
    %v1704 = vmul.f32 %v1685, 1.442695
    %v1705 = vpow.pop %v1704
    %v1706 = vmul.f32 %v1686, 1.442695
    %v1707 = vpow.pop %v1706
    %v1708 = vmul.f32 %v1687, 1.442695
    %v1709 = vpow.pop %v1708
    %v1710 = vmul.f32 %v1688, 1.442695
    %v1711 = vpow.pop %v1710
    %v1712 = vmul.f32 %v1689, 1.442695
    %v1713 = vpow.pop %v1712
    %v1714 = vmul.f32 %v1690, 1.442695
    %v1715 = vpow.pop %v1714
    %v1716 = vmul.f32 %v1691, 1.442695
    %v1717 = vpow.pop %v1716
    %v1718 = vmul.f32 %v1692, 1.442695
    %v1719 = vpow.pop %v1718
    %v1720 = vmul.f32 %v1693, 1.442695
    %v1721 = vpow.pop %v1720
    %v1722 = vmul.f32 %v1694, 1.442695
    %v1723 = vpow.pop %v1722
    %v1724 = vmul.f32 %v1695, 1.442695
    %v1725 = vpow.pop %v1724
    %v1726 = vmul.f32 %v1696, 1.442695
    %v1727 = vpow.pop %v1726
    %v1728 = vmul.f32 %v1697, 1.442695
    %v1729 = vpow.pop %v1728
    %1746 = vrot.lane.b32.xlu0 %v1699, 120
    %v1747 = vpop.permute.xlu0 %1746
    %1748 = vrot.lane.b32.xlu0 %v1701, 120
    %v1749 = vpop.permute.xlu0 %1748
    %1750 = vrot.lane.b32.xlu0 %v1703, 120
    %v1751 = vpop.permute.xlu0 %1750
    %1752 = vrot.lane.b32.xlu0 %v1705, 120
    %v1753 = vpop.permute.xlu0 %1752
    %1754 = vrot.lane.b32.xlu0 %v1707, 120
    %v1755 = vpop.permute.xlu0 %1754
    %1756 = vrot.lane.b32.xlu0 %v1709, 120
    %v1757 = vpop.permute.xlu0 %1756
    %1758 = vrot.lane.b32.xlu0 %v1711, 120
    %v1759 = vpop.permute.xlu0 %1758
    %1760 = vrot.lane.b32.xlu0 %v1713, 120
    %v1761 = vpop.permute.xlu0 %1760
    %1762 = vrot.lane.b32.xlu0 %v1715, 120
    %v1763 = vpop.permute.xlu0 %1762
    %1764 = vrot.lane.b32.xlu0 %v1717, 120
    %v1765 = vpop.permute.xlu0 %1764
    %1766 = vrot.lane.b32.xlu0 %v1719, 120
    %v1767 = vpop.permute.xlu0 %1766
    %1768 = vrot.lane.b32.xlu0 %v1721, 120
    %v1769 = vpop.permute.xlu0 %1768
    %1770 = vrot.lane.b32.xlu0 %v1723, 120
    %v1771 = vpop.permute.xlu0 %1770
    %1772 = vrot.lane.b32.xlu0 %v1725, 120
    %v1773 = vpop.permute.xlu0 %1772
    %1774 = vrot.lane.b32.xlu0 %v1727, 120
    %v1775 = vpop.permute.xlu0 %1774
    %1776 = vrot.lane.b32.xlu0 %v1729, 120
    %v1777 = vpop.permute.xlu0 %1776
    %v1794 = vsel %vm1281, %v1747, 0.0
    %1795 = vadd.xlane.f32.xlu0 %v1794
    %v1796 = vpop.xlane.xlu0 %1795
    %v1797 = vsel %vm1281, %v1749, 0.0
    %1798 = vadd.xlane.f32.xlu0 %v1797
    %v1799 = vpop.xlane.xlu0 %1798
    %v1800 = vsel %vm1281, %v1751, 0.0
    %1801 = vadd.xlane.f32.xlu0 %v1800
    %v1802 = vpop.xlane.xlu0 %1801
    %v1803 = vsel %vm1281, %v1753, 0.0
    %1804 = vadd.xlane.f32.xlu0 %v1803
    %v1805 = vpop.xlane.xlu0 %1804
    %v1806 = vsel %vm1281, %v1755, 0.0
    %1807 = vadd.xlane.f32.xlu0 %v1806
    %v1808 = vpop.xlane.xlu0 %1807
    %v1809 = vsel %vm1281, %v1757, 0.0
    %1810 = vadd.xlane.f32.xlu0 %v1809
    %v1811 = vpop.xlane.xlu0 %1810
    %v1812 = vsel %vm1281, %v1759, 0.0
    %1813 = vadd.xlane.f32.xlu0 %v1812
    %v1814 = vpop.xlane.xlu0 %1813
    %v1815 = vsel %vm1281, %v1761, 0.0
    %1816 = vadd.xlane.f32.xlu0 %v1815
    %v1817 = vpop.xlane.xlu0 %1816
    %v1818 = vsel %vm1281, %v1763, 0.0
    %1819 = vadd.xlane.f32.xlu0 %v1818
    %v1820 = vpop.xlane.xlu0 %1819
    %v1821 = vsel %vm1281, %v1765, 0.0
    %1822 = vadd.xlane.f32.xlu0 %v1821
    %v1823 = vpop.xlane.xlu0 %1822
    %v1824 = vsel %vm1281, %v1767, 0.0
    %1825 = vadd.xlane.f32.xlu0 %v1824
    %v1826 = vpop.xlane.xlu0 %1825
    %v1827 = vsel %vm1281, %v1769, 0.0
    %1828 = vadd.xlane.f32.xlu0 %v1827
    %v1829 = vpop.xlane.xlu0 %1828
    %v1830 = vsel %vm1281, %v1771, 0.0
    %1831 = vadd.xlane.f32.xlu0 %v1830
    %v1832 = vpop.xlane.xlu0 %1831
    %v1833 = vsel %vm1281, %v1773, 0.0
    %1834 = vadd.xlane.f32.xlu0 %v1833
    %v1835 = vpop.xlane.xlu0 %1834
    %v1836 = vsel %vm1281, %v1775, 0.0
    %1837 = vadd.xlane.f32.xlu0 %v1836
    %v1838 = vpop.xlane.xlu0 %1837
    %v1839 = vsel %vm1281, %v1777, 0.0
    %1840 = vadd.xlane.f32.xlu0 %v1839
    %v1841 = vpop.xlane.xlu0 %1840
    %v1842 = vlog2.pop %v1796
    %v1843 = vmul.f32 %v1842, 0.6931472
    %v1844 = vlog2.pop %v1799
    %v1845 = vmul.f32 %v1844, 0.6931472
    %v1846 = vlog2.pop %v1802
    %v1847 = vmul.f32 %v1846, 0.6931472
    %v1848 = vlog2.pop %v1805
    %v1849 = vmul.f32 %v1848, 0.6931472
    %v1850 = vlog2.pop %v1808
    %v1851 = vmul.f32 %v1850, 0.6931472
    %v1852 = vlog2.pop %v1811
    %v1853 = vmul.f32 %v1852, 0.6931472
    %v1854 = vlog2.pop %v1814
    %v1855 = vmul.f32 %v1854, 0.6931472
    %v1856 = vlog2.pop %v1817
    %v1857 = vmul.f32 %v1856, 0.6931472
    %v1858 = vlog2.pop %v1820
    %v1859 = vmul.f32 %v1858, 0.6931472
    %v1860 = vlog2.pop %v1823
    %v1861 = vmul.f32 %v1860, 0.6931472
    %v1862 = vlog2.pop %v1826
    %v1863 = vmul.f32 %v1862, 0.6931472
    %v1864 = vlog2.pop %v1829
    %v1865 = vmul.f32 %v1864, 0.6931472
    %v1866 = vlog2.pop %v1832
    %v1867 = vmul.f32 %v1866, 0.6931472
    %v1868 = vlog2.pop %v1835
    %v1869 = vmul.f32 %v1868, 0.6931472
    %v1870 = vlog2.pop %v1838
    %v1871 = vmul.f32 %v1870, 0.6931472
    %v1872 = vlog2.pop %v1841
    %v1873 = vmul.f32 %v1872, 0.6931472
    %v1874 = vsub.f32 %v1682, %v1843
    %v1875 = vsub.f32 %v1683, %v1845
    %v1876 = vsub.f32 %v1684, %v1847
    %v1877 = vsub.f32 %v1685, %v1849
    %v1878 = vsub.f32 %v1686, %v1851
    %v1879 = vsub.f32 %v1687, %v1853
    %v1880 = vsub.f32 %v1688, %v1855
    %v1881 = vsub.f32 %v1689, %v1857
    %v1882 = vsub.f32 %v1690, %v1859
    %v1883 = vsub.f32 %v1691, %v1861
    %v1884 = vsub.f32 %v1692, %v1863
    %v1885 = vsub.f32 %v1693, %v1865
    %v1886 = vsub.f32 %v1694, %v1867
    %v1887 = vsub.f32 %v1695, %v1869
    %v1888 = vsub.f32 %v1696, %v1871
    %v1889 = vsub.f32 %v1697, %v1873
    %v1890 = vsel %vm1281, %v1617, %v1874
    %v1891 = vsel %vm1281, %v1618, %v1875
    %v1892 = vsel %vm1281, %v1619, %v1876
    %v1893 = vsel %vm1281, %v1620, %v1877
    %v1894 = vsel %vm1281, %v1621, %v1878
    %v1895 = vsel %vm1281, %v1622, %v1879
    %v1896 = vsel %vm1281, %v1623, %v1880
    %v1897 = vsel %vm1281, %v1624, %v1881
    %v1898 = vsel %vm1281, %v1625, %v1882
    %v1899 = vsel %vm1281, %v1626, %v1883
    %v1900 = vsel %vm1281, %v1627, %v1884
    %v1901 = vsel %vm1281, %v1628, %v1885
    %v1902 = vsel %vm1281, %v1629, %v1886
    %v1903 = vsel %vm1281, %v1630, %v1887
    %v1904 = vsel %vm1281, %v1631, %v1888
    %v1905 = vsel %vm1281, %v1632, %v1889
    %vm1906 = vcmask 130048
    %1907 = vst.msk [vmem:[%s9] sm:$0xff] %vm1906, %v1890
    %1908 = vst.msk [vmem:[%s9 + $0x8] sm:$0xff] %vm1906, %v1891
    %1909 = vst.msk [vmem:[%s9 + $0x10] sm:$0xff] %vm1906, %v1892
    %1910 = vst.msk [vmem:[%s9 + $0x18] sm:$0xff] %vm1906, %v1893
    %1911 = vst.msk [vmem:[%s9 + $0x20] sm:$0xff] %vm1906, %v1894
    %1912 = vst.msk [vmem:[%s9 + $0x28] sm:$0xff] %vm1906, %v1895
    %1913 = vst.msk [vmem:[%s9 + $0x30] sm:$0xff] %vm1906, %v1896
    %1914 = vst.msk [vmem:[%s9 + $0x38] sm:$0xff] %vm1906, %v1897
    %1915 = vst.msk [vmem:[%s9 + $0x40] sm:$0xff] %vm1906, %v1898
    %1916 = vst.msk [vmem:[%s9 + $0x48] sm:$0xff] %vm1906, %v1899
    %1917 = vst.msk [vmem:[%s9 + $0x50] sm:$0xff] %vm1906, %v1900
    %1918 = vst.msk [vmem:[%s9 + $0x58] sm:$0xff] %vm1906, %v1901
    %1919 = vst.msk [vmem:[%s9 + $0x60] sm:$0xff] %vm1906, %v1902
    %1920 = vst.msk [vmem:[%s9 + $0x68] sm:$0xff] %vm1906, %v1903
    %1921 = vst.msk [vmem:[%s9 + $0x70] sm:$0xff] %vm1906, %v1904
    %1922 = vst.msk [vmem:[%s9 + $0x78] sm:$0xff] %vm1906, %v1905
    // Predicated region
    $region42: #{lpa_gcn_model.1} parent=1 // pred_check
      _
    $region43: #{lpa_gcn_model.1} parent=1 // pred_check_branch
      %1924 = sbr.rel (0) target = $region45
    $region44: #{lpa_gcn_model.1} parent=1 // pred_region
      _
    $region45: #{lpa_gcn_model.1} parent=1 // pred_fallthru
      _
    // Predicated region
    $region46: #{lpa_gcn_model.1} parent=1 // pred_check
      _
    $region47: #{lpa_gcn_model.1} parent=1 // pred_check_branch
      %1926 = sbr.rel (0) target = $region49
    $region48: #{lpa_gcn_model.1} parent=1 // pred_region
      _
    $region49: #{lpa_gcn_model.1} parent=1 // pred_fallthru
      _
    %1927 = vsyncpa [#allocation3], 1

</llo_original>
